<compile_context>
chip_gen: v5e
topology: v5e:2x2
jax: 0.10.0
libtpu: 0.0.40
codegen_flags: <defaults>
</compile_context>

<pallas_src>
import functools

import jax
import jax.numpy as jnp
from jax.experimental import pallas as pl
from jax.experimental.pallas import tpu as pltpu

LRELU_SLOPE = 0.2
BN_EPS = 1e-5
NUM_SPLIT = 2          # leading "parallel" grid axis; uses both TCs on v7x
MAX_ROW_TILE = 2048    # lanes per tile (bf16 patch tile @ 2048 lanes ~ 256 KiB)


def _round_up(x, m):
    return (x + m - 1) // m * m


# ----------------------- kernel 1: conv1 matmul + BN1 stats ----------------------- #
def _conv1_stats_kernel(r_total, tr, p_ref, w_ref, b_ref, y_ref, sum_ref, ssq_ref):
    # p_ref : (K, TR)  bf16 transposed im2col patches
    # w_ref : (Cs, K)  bf16        b_ref: (Cs, 1) f32
    # y_ref : (Cs, TR) f32
    # sum_ref/ssq_ref: (Cs, 1) f32 per-core accumulators (resident across j axis)
    j = pl.program_id(1)
    y = jnp.dot(w_ref[...], p_ref[...], preferred_element_type=jnp.float32)
    y = y + b_ref[...]
    y_ref[...] = y

    @pl.when(j == 0)
    def _():
        sum_ref[...] = jnp.zeros_like(sum_ref)
        ssq_ref[...] = jnp.zeros_like(ssq_ref)

    # mask lanes beyond the real row count (R padding) out of the statistics
    base = (pl.program_id(0) * pl.num_programs(1) + j) * tr
    lane = jax.lax.broadcasted_iota(jnp.int32, y.shape, 1) + base
    ym = jnp.where(lane < r_total, y, 0.0)
    sum_ref[...] += jnp.sum(ym, axis=1, keepdims=True)
    ssq_ref[...] += jnp.sum(ym * ym, axis=1, keepdims=True)


# -------------- kernel 2: BN1 + LeakyReLU + 1x1 conv matmul + BN2 stats ------------ #
def _bn1_conv2_stats_kernel(r_total, tr, y_ref, a1_ref, c1_ref, w2_ref,
                            z_ref, sum_ref, ssq_ref):
    # y_ref: (Cs, TR) f32   a1/c1: (Cs, 1) f32   w2_ref: (Cs, Cs) f32
    j = pl.program_id(1)
    y = y_ref[...] * a1_ref[...] + c1_ref[...]
    y = jnp.where(y >= 0, y, LRELU_SLOPE * y)
    z = jnp.dot(w2_ref[...], y, preferred_element_type=jnp.float32)
    z_ref[...] = z

    @pl.when(j == 0)
    def _():
        sum_ref[...] = jnp.zeros_like(sum_ref)
        ssq_ref[...] = jnp.zeros_like(ssq_ref)

    base = (pl.program_id(0) * pl.num_programs(1) + j) * tr
    lane = jax.lax.broadcasted_iota(jnp.int32, z.shape, 1) + base
    zm = jnp.where(lane < r_total, z, 0.0)
    sum_ref[...] += jnp.sum(zm, axis=1, keepdims=True)
    ssq_ref[...] += jnp.sum(zm * zm, axis=1, keepdims=True)


# --------------------------- kernel 3: BN2 + LeakyReLU ----------------------------- #
def _bn2_lrelu_kernel(z_ref, a2_ref, c2_ref, o_ref):
    z = z_ref[...] * a2_ref[...] + c2_ref[...]
    o_ref[...] = jnp.where(z >= 0, z, LRELU_SLOPE * z).astype(o_ref.dtype)


# ---------------------------------- glue (JAX) ------------------------------------- #
def _spectral_normalize(w, key, n_iter=1, eps=1e-12):
    """PyTorch-style spectral_norm: power iteration on w.reshape(out, -1)."""
    w_mat = w.reshape(w.shape[0], -1)
    u = jax.random.normal(key, (w_mat.shape[0],), dtype=w.dtype)
    u = u / (jnp.linalg.norm(u) + eps)
    for _ in range(n_iter):
        v = w_mat.T @ u
        v = v / (jnp.linalg.norm(v) + eps)
        u = w_mat @ v
        u = u / (jnp.linalg.norm(u) + eps)
    sigma = u @ (w_mat @ v)
    return w / sigma


def _im2col_t_4x4_s2_p1(x_nhwc):
    """4x4 stride-2 pad-1 patches, transposed. Returns (16*Cin, N*OH*OW)."""
    n, h, w, c = x_nhwc.shape
    oh, ow = h // 2, w // 2
    xp = jnp.pad(x_nhwc, ((0, 0), (1, 1), (1, 1), (0, 0)))
    cols = []
    for kh in range(4):
        for kw in range(4):
            cols.append(xp[:, kh:kh + 2 * oh:2, kw:kw + 2 * ow:2, :])
    p = jnp.stack(cols, axis=0)                 # (16, N, OH, OW, Cin)
    p = jnp.transpose(p, (0, 4, 1, 2, 3))       # (16, Cin, N, OH, OW)
    return p.reshape(16 * c, n * oh * ow), (n, oh, ow)


@jax.jit
def downblockpatch_forward(x_nchw, w1_t, b1, w2_t):
    """x_nchw: (N, Cin, H, W).  PyTorch-layout weights:
       w1_t: (Cout, Cin, 4, 4), b1: (Cout,), w2_t: (Cout, Cout, 1, 1)."""
    cout = w1_t.shape[0]
    x_nhwc = jnp.transpose(x_nchw, (0, 2, 3, 1))
    pt, (n, oh, ow) = _im2col_t_4x4_s2_p1(x_nhwc)       # (K, R)
    k, r = pt.shape

    cs = _round_up(cout, 8)                              # sublane granule only
    tr = min(MAX_ROW_TILE, _round_up(r, 128))            # lane-dense row tile
    rp = _round_up(r, tr * NUM_SPLIT)
    n_per = rp // (tr * NUM_SPLIT)
    grid = (NUM_SPLIT, n_per)

    row_map = lambda c, j: (0, c * n_per + j)
    bcast_map = lambda c, j: (0, 0)
    stat_map = lambda c, j: (c, 0)

    pt_p = jnp.pad(pt, ((0, 0), (0, rp - r))).astype(jnp.bfloat16)

    w1_mat = jnp.transpose(w1_t, (2, 3, 1, 0)).reshape(k, cout)     # im2col layout
    w1t_p = jnp.pad(w1_mat.T, ((0, cs - cout), (0, 0))).astype(jnp.bfloat16)   # (Cs, K)
    b1_p = jnp.pad(b1.reshape(cout, 1), ((0, cs - cout), (0, 0))).astype(jnp.float32)
    w2_p = jnp.pad(w2_t[:, :, 0, 0],
                   ((0, cs - cout), (0, cs - cout))).astype(jnp.float32)       # (Cs, Cs)

    mk_params = lambda sem: pltpu.CompilerParams(
        dimension_semantics=sem,
        vmem_limit_bytes=32 * 1024 * 1024,
        allow_input_fusion=[0])

    # ---- pass 1: conv 4x4/s2/p1 as (Cs,K)x(K,TR) matmul (+bias) + BN1 sum/sumsq ----
    y, s1, q1 = pl.pallas_call(
        functools.partial(_conv1_stats_kernel, r, tr),
        out_shape=(jax.ShapeDtypeStruct((cs, rp), jnp.float32),
                   jax.ShapeDtypeStruct((NUM_SPLIT * cs, 1), jnp.float32),
                   jax.ShapeDtypeStruct((NUM_SPLIT * cs, 1), jnp.float32)),
        grid=grid,
        in_specs=[
            pl.BlockSpec((k, tr), row_map),
            pl.BlockSpec((cs, k), bcast_map),
            pl.BlockSpec((cs, 1), bcast_map),
        ],
        out_specs=(
            pl.BlockSpec((cs, tr), row_map),
            pl.BlockSpec((cs, 1), stat_map),
            pl.BlockSpec((cs, 1), stat_map),
        ),
        compiler_params=mk_params(("parallel", "arbitrary")),
    )(pt_p, w1t_p, b1_p)

    inv_r = jnp.float32(1.0 / r)
    s1c = s1.reshape(NUM_SPLIT, cs, 1).sum(axis=0)
    q1c = q1.reshape(NUM_SPLIT, cs, 1).sum(axis=0)
    mean1 = s1c * inv_r
    var1 = jnp.maximum(q1c * inv_r - mean1 * mean1, 0.0)    # E[x^2]-mean^2, f32, clamped
    a1 = jax.lax.rsqrt(var1 + BN_EPS)
    c1 = -mean1 * a1

    # ---- pass 2: BN1 + LeakyReLU + 1x1 conv + BN2 sum/sumsq ----
    z, s2, q2 = pl.pallas_call(
        functools.partial(_bn1_conv2_stats_kernel, r, tr),
        out_shape=(jax.ShapeDtypeStruct((cs, rp), jnp.float32),
                   jax.ShapeDtypeStruct((NUM_SPLIT * cs, 1), jnp.float32),
                   jax.ShapeDtypeStruct((NUM_SPLIT * cs, 1), jnp.float32)),
        grid=grid,
        in_specs=[
            pl.BlockSpec((cs, tr), row_map),
            pl.BlockSpec((cs, 1), bcast_map),
            pl.BlockSpec((cs, 1), bcast_map),
            pl.BlockSpec((cs, cs), bcast_map),
        ],
        out_specs=(
            pl.BlockSpec((cs, tr), row_map),
            pl.BlockSpec((cs, 1), stat_map),
            pl.BlockSpec((cs, 1), stat_map),
        ),
        compiler_params=mk_params(("parallel", "arbitrary")),
    )(y, a1, c1, w2_p)

    s2c = s2.reshape(NUM_SPLIT, cs, 1).sum(axis=0)
    q2c = q2.reshape(NUM_SPLIT, cs, 1).sum(axis=0)
    mean2 = s2c * inv_r
    var2 = jnp.maximum(q2c * inv_r - mean2 * mean2, 0.0)
    a2 = jax.lax.rsqrt(var2 + BN_EPS)
    c2 = -mean2 * a2

    # ---- pass 3: BN2 + LeakyReLU (pure elementwise, fully parallel) ----
    out_t = pl.pallas_call(
        _bn2_lrelu_kernel,
        out_shape=jax.ShapeDtypeStruct((cs, rp), x_nchw.dtype),
        grid=grid,
        in_specs=[
            pl.BlockSpec((cs, tr), row_map),
            pl.BlockSpec((cs, 1), bcast_map),
            pl.BlockSpec((cs, 1), bcast_map),
        ],
        out_specs=pl.BlockSpec((cs, tr), row_map),
        compiler_params=mk_params(("parallel", "parallel")),
    )(z, a2, c2)

    out = out_t[:cout, :r].reshape(cout, n, oh, ow)
    return jnp.transpose(out, (1, 0, 2, 3))              # back to NCHW


# ----------------------------- f32 reference (XLA) --------------------------------- #
def _reference_forward(x_nchw, w1_sn, b1, w2_sn):
    cout = w1_sn.shape[0]
    x_nhwc = jnp.transpose(x_nchw, (0, 2, 3, 1))
    pt, (n, oh, ow) = _im2col_t_4x4_s2_p1(x_nhwc)
    w1_mat = jnp.transpose(w1_sn, (2, 3, 1, 0)).reshape(-1, cout)
    y = w1_mat.T @ pt + b1[:, None]
    m = y.mean(1, keepdims=True)
    v = jnp.mean((y - m) ** 2, axis=1, keepdims=True)
    y = (y - m) * jax.lax.rsqrt(v + BN_EPS)
    y = jnp.where(y >= 0, y, LRELU_SLOPE * y)
    z = w2_sn[:, :, 0, 0] @ y
    m = z.mean(1, keepdims=True)
    v = jnp.mean((z - m) ** 2, axis=1, keepdims=True)
    z = (z - m) * jax.lax.rsqrt(v + BN_EPS)
    z = jnp.where(z >= 0, z, LRELU_SLOPE * z)
    return jnp.transpose(z.reshape(cout, n, oh, ow), (1, 0, 2, 3))


# -------------------------------------- main --------------------------------------- #
if __name__ == "__main__":
    N, CIN, H, W = 2, 4, 16, 16
    COUT = 8

    root = jax.random.PRNGKey(0)
    kx, kw1, kb1, kw2, ku1, ku2 = jax.random.split(root, 6)

    x = jax.random.normal(kx, (N, CIN, H, W), dtype=jnp.float32)
    w1 = 0.1 * jax.random.normal(kw1, (COUT, CIN, 4, 4), dtype=jnp.float32)
    b1 = 0.1 * jax.random.normal(kb1, (COUT,), dtype=jnp.float32)
    w2 = 0.1 * jax.random.normal(kw2, (COUT, COUT, 1, 1), dtype=jnp.float32)

    w1_sn = _spectral_normalize(w1, ku1)
    w2_sn = _spectral_normalize(w2, ku2)

    out = downblockpatch_forward(x, w1_sn, b1, w2_sn)
    out = jax.block_until_ready(out)

    assert out.shape == (N, COUT, H // 2, W // 2), out.shape
    assert jnp.all(jnp.isfinite(out))

    # loose tolerance: conv-1 MXU operands are bf16 (everything else f32)
    ref = _reference_forward(x, w1_sn, b1, w2_sn)
    err = float(jnp.max(jnp.abs(out - ref)))
    assert err < 0.2, err

    print("KERNEL_OK")
</pallas_src>

<mosaic_0001>
module attributes {stable_mosaic.version = 11 : i64} {
  func.func @_conv1_stats_kernel(%arg0: i32, %arg1: i32, %arg2: memref<64x128xbf16, #tpu.memory_space<vmem>>, %arg3: memref<8x64xbf16, #tpu.memory_space<vmem>>, %arg4: memref<8x1xf32, #tpu.memory_space<vmem>>, %arg5: memref<8x128xf32, #tpu.memory_space<vmem>>, %arg6: memref<8x1xf32, #tpu.memory_space<vmem>>, %arg7: memref<8x1xf32, #tpu.memory_space<vmem>>) attributes {dimension_semantics = [#tpu.dimension_semantics<parallel>, #tpu.dimension_semantics<arbitrary>], iteration_bounds = array<i64: 2, 1>, scalar_prefetch = 0 : i64, scratch_operands = 0 : i64, tpu.core_type = #tpu.core_type<tc>, window_params = [{transform_indices = @transform_0, window_bounds = array<i64: 64, 128>}, {pipeline_mode = #tpu.pipeline_mode<synchronous>, transform_indices = @transform_1, window_bounds = array<i64: 8, 64>}, {pipeline_mode = #tpu.pipeline_mode<synchronous>, transform_indices = @transform_2, window_bounds = array<i64: 8, 1>}, {transform_indices = @transform_3, window_bounds = array<i64: 8, 128>}, {transform_indices = @transform_4, window_bounds = array<i64: 8, 1>}, {transform_indices = @transform_5, window_bounds = array<i64: 8, 1>}]} {
    %c0 = arith.constant 0 : index
    %c0_0 = arith.constant 0 : index
    %0 = vector.load %arg3[%c0, %c0_0] : memref<8x64xbf16, #tpu.memory_space<vmem>>, vector<8x64xbf16>
    %c0_1 = arith.constant 0 : index
    %c0_2 = arith.constant 0 : index
    %1 = vector.load %arg2[%c0_1, %c0_2] : memref<64x128xbf16, #tpu.memory_space<vmem>>, vector<64x128xbf16>
    %cst = arith.constant dense<0.000000e+00> : vector<8x128xf32>
    %2 = tpu.matmul %0, %1, %cst {dimension_numbers = #tpu.dot_dimension_numbers<[1], [0], [0], [1], [0, 0, 1, 1], [], []>} : vector<8x64xbf16>, vector<64x128xbf16>, vector<8x128xf32> -> vector<8x128xf32>
    %c0_3 = arith.constant 0 : index
    %c0_4 = arith.constant 0 : index
    %3 = vector.load %arg4[%c0_3, %c0_4] : memref<8x1xf32, #tpu.memory_space<vmem>>, vector<8x1xf32>
    %4 = vector.broadcast %3 : vector<8x1xf32> to vector<8x128xf32>
    %5 = arith.addf %2, %4 : vector<8x128xf32>
    %c0_5 = arith.constant 0 : index
    %c0_6 = arith.constant 0 : index
    %6 = vector.load %arg5[%c0_5, %c0_6] : memref<8x128xf32, #tpu.memory_space<vmem>>, vector<8x128xf32>
    tpu.vector_store %arg5[%c0_5, %c0_6], %5 {strides = array<i32>} : memref<8x128xf32, #tpu.memory_space<vmem>>, vector<8x128xf32>,
    %c0_i32 = arith.constant 0 : i32
    %7 = arith.cmpi eq, %arg1, %c0_i32 : i32
    %8 = arith.extui %7 : i1 to i32
    %c0_i32_7 = arith.constant 0 : i32
    %9 = arith.cmpi ne, %8, %c0_i32_7 : i32
    scf.if %9 {
      %cst_20 = arith.constant 0.000000e+00 : f32
      %31 = vector.broadcast %cst_20 : f32 to vector<8x1xf32>
      %c0_21 = arith.constant 0 : index
      %c0_22 = arith.constant 0 : index
      %32 = vector.load %arg6[%c0_21, %c0_22] : memref<8x1xf32, #tpu.memory_space<vmem>>, vector<8x1xf32>
      tpu.vector_store %arg6[%c0_21, %c0_22], %31 {strides = array<i32>} : memref<8x1xf32, #tpu.memory_space<vmem>>, vector<8x1xf32>,
      %cst_23 = arith.constant 0.000000e+00 : f32
      %33 = vector.broadcast %cst_23 : f32 to vector<8x1xf32>
      %c0_24 = arith.constant 0 : index
      %c0_25 = arith.constant 0 : index
      %34 = vector.load %arg7[%c0_24, %c0_25] : memref<8x1xf32, #tpu.memory_space<vmem>>, vector<8x1xf32>
      tpu.vector_store %arg7[%c0_24, %c0_25], %33 {strides = array<i32>} : memref<8x1xf32, #tpu.memory_space<vmem>>, vector<8x1xf32>,
    } else {
    }
    %c1_i32 = arith.constant 1 : i32
    %10 = arith.muli %arg0, %c1_i32 : i32
    %11 = arith.addi %10, %arg1 : i32
    %c128_i32 = arith.constant 128 : i32
    %12 = arith.muli %11, %c128_i32 : i32
    %13 = tpu.iota {dimensions = array<i32: 1>} : vector<8x128xi32>
    %14 = vector.broadcast %12 : i32 to vector<8x128xi32>
    %15 = arith.addi %13, %14 : vector<8x128xi32>
    %c128_i32_8 = arith.constant 128 : i32
    %16 = vector.broadcast %c128_i32_8 : i32 to vector<8x128xi32>
    %17 = arith.cmpi slt, %15, %16 : vector<8x128xi32>
    %cst_9 = arith.constant 0.000000e+00 : f32
    %18 = vector.broadcast %cst_9 : f32 to vector<8x128xf32>
    %19 = arith.select %17, %5, %18 : vector<8x128xi1>, vector<8x128xf32>
    %c0_10 = arith.constant 0 : index
    %c0_11 = arith.constant 0 : index
    %20 = vector.load %arg6[%c0_10, %c0_11] : memref<8x1xf32, #tpu.memory_space<vmem>>, vector<8x1xf32>
    %cst_12 = arith.constant dense<0.000000e+00> : vector<8xf32>
    %21 = vector.multi_reduction <add>, %19, %cst_12 [1] : vector<8x128xf32> to vector<8xf32>
    %22 = vector.shape_cast %21 : vector<8xf32> to vector<8x1xf32>
    %23 = arith.addf %20, %22 : vector<8x1xf32>
    %c0_13 = arith.constant 0 : index
    %c0_14 = arith.constant 0 : index
    %24 = vector.load %arg6[%c0_13, %c0_14] : memref<8x1xf32, #tpu.memory_space<vmem>>, vector<8x1xf32>
    tpu.vector_store %arg6[%c0_13, %c0_14], %23 {strides = array<i32>} : memref<8x1xf32, #tpu.memory_space<vmem>>, vector<8x1xf32>,
    %c0_15 = arith.constant 0 : index
    %c0_16 = arith.constant 0 : index
    %25 = vector.load %arg7[%c0_15, %c0_16] : memref<8x1xf32, #tpu.memory_space<vmem>>, vector<8x1xf32>
    %26 = arith.mulf %19, %19 : vector<8x128xf32>
    %cst_17 = arith.constant dense<0.000000e+00> : vector<8xf32>
    %27 = vector.multi_reduction <add>, %26, %cst_17 [1] : vector<8x128xf32> to vector<8xf32>
    %28 = vector.shape_cast %27 : vector<8xf32> to vector<8x1xf32>
    %29 = arith.addf %25, %28 : vector<8x1xf32>
    %c0_18 = arith.constant 0 : index
    %c0_19 = arith.constant 0 : index
    %30 = vector.load %arg7[%c0_18, %c0_19] : memref<8x1xf32, #tpu.memory_space<vmem>>, vector<8x1xf32>
    tpu.vector_store %arg7[%c0_18, %c0_19], %29 {strides = array<i32>} : memref<8x1xf32, #tpu.memory_space<vmem>>, vector<8x1xf32>,
    return
  }
  func.func @transform_0(%arg0: i32, %arg1: i32) -> (i32, i32) {
    %c1_i32 = arith.constant 1 : i32
    %0 = arith.muli %arg0, %c1_i32 : i32
    %1 = arith.addi %0, %arg1 : i32
    %c0_i32 = arith.constant 0 : i32
    %c0_i32_0 = arith.constant 0 : i32
    return %c0_i32, %1 : i32, i32
  }
  func.func @transform_1(%arg0: i32, %arg1: i32) -> (i32, i32) {
    %c0_i32 = arith.constant 0 : i32
    %c0_i32_0 = arith.constant 0 : i32
    %c0_i32_1 = arith.constant 0 : i32
    return %c0_i32, %c0_i32_0 : i32, i32
  }
  func.func @transform_2(%arg0: i32, %arg1: i32) -> (i32, i32) {
    %c0_i32 = arith.constant 0 : i32
    %c0_i32_0 = arith.constant 0 : i32
    %c0_i32_1 = arith.constant 0 : i32
    return %c0_i32, %c0_i32_0 : i32, i32
  }
  func.func @transform_3(%arg0: i32, %arg1: i32) -> (i32, i32) {
    %c1_i32 = arith.constant 1 : i32
    %0 = arith.muli %arg0, %c1_i32 : i32
    %1 = arith.addi %0, %arg1 : i32
    %c0_i32 = arith.constant 0 : i32
    %c0_i32_0 = arith.constant 0 : i32
    return %c0_i32, %1 : i32, i32
  }
  func.func @transform_4(%arg0: i32, %arg1: i32) -> (i32, i32) {
    %c0_i32 = arith.constant 0 : i32
    %c0_i32_0 = arith.constant 0 : i32
    return %arg0, %c0_i32 : i32, i32
  }
  func.func @transform_5(%arg0: i32, %arg1: i32) -> (i32, i32) {
    %c0_i32 = arith.constant 0 : i32
    %c0_i32_0 = arith.constant 0 : i32
    return %arg0, %c0_i32 : i32, i32
  }
}

module attributes {stable_mosaic.version = 11 : i64} {
  func.func @_bn1_conv2_stats_kernel(%arg0: i32, %arg1: i32, %arg2: memref<8x128xf32, #tpu.memory_space<vmem>>, %arg3: memref<8x1xf32, #tpu.memory_space<vmem>>, %arg4: memref<8x1xf32, #tpu.memory_space<vmem>>, %arg5: memref<8x8xf32, #tpu.memory_space<vmem>>, %arg6: memref<8x128xf32, #tpu.memory_space<vmem>>, %arg7: memref<8x1xf32, #tpu.memory_space<vmem>>, %arg8: memref<8x1xf32, #tpu.memory_space<vmem>>) attributes {dimension_semantics = [#tpu.dimension_semantics<parallel>, #tpu.dimension_semantics<arbitrary>], iteration_bounds = array<i64: 2, 1>, scalar_prefetch = 0 : i64, scratch_operands = 0 : i64, tpu.core_type = #tpu.core_type<tc>, window_params = [{transform_indices = @transform_0, window_bounds = array<i64: 8, 128>}, {pipeline_mode = #tpu.pipeline_mode<synchronous>, transform_indices = @transform_1, window_bounds = array<i64: 8, 1>}, {pipeline_mode = #tpu.pipeline_mode<synchronous>, transform_indices = @transform_2, window_bounds = array<i64: 8, 1>}, {pipeline_mode = #tpu.pipeline_mode<synchronous>, transform_indices = @transform_3, window_bounds = array<i64: 8, 8>}, {transform_indices = @transform_4, window_bounds = array<i64: 8, 128>}, {transform_indices = @transform_5, window_bounds = array<i64: 8, 1>}, {transform_indices = @transform_6, window_bounds = array<i64: 8, 1>}]} {
    %c0 = arith.constant 0 : index
    %c0_0 = arith.constant 0 : index
    %0 = vector.load %arg2[%c0, %c0_0] : memref<8x128xf32, #tpu.memory_space<vmem>>, vector<8x128xf32>
    %c0_1 = arith.constant 0 : index
    %c0_2 = arith.constant 0 : index
    %1 = vector.load %arg3[%c0_1, %c0_2] : memref<8x1xf32, #tpu.memory_space<vmem>>, vector<8x1xf32>
    %2 = vector.broadcast %1 : vector<8x1xf32> to vector<8x128xf32>
    %3 = arith.mulf %0, %2 : vector<8x128xf32>
    %c0_3 = arith.constant 0 : index
    %c0_4 = arith.constant 0 : index
    %4 = vector.load %arg4[%c0_3, %c0_4] : memref<8x1xf32, #tpu.memory_space<vmem>>, vector<8x1xf32>
    %5 = vector.broadcast %4 : vector<8x1xf32> to vector<8x128xf32>
    %6 = arith.addf %3, %5 : vector<8x128xf32>
    %cst = arith.constant 0.000000e+00 : f32
    %7 = vector.broadcast %cst : f32 to vector<8x128xf32>
    %8 = arith.cmpf oge, %6, %7 : vector<8x128xf32>
    %cst_5 = arith.constant 2.000000e-01 : f32
    %9 = vector.broadcast %cst_5 : f32 to vector<8x128xf32>
    %10 = arith.mulf %9, %6 : vector<8x128xf32>
    %11 = arith.select %8, %6, %10 : vector<8x128xi1>, vector<8x128xf32>
    %c0_6 = arith.constant 0 : index
    %c0_7 = arith.constant 0 : index
    %12 = vector.load %arg5[%c0_6, %c0_7] : memref<8x8xf32, #tpu.memory_space<vmem>>, vector<8x8xf32>
    %cst_8 = arith.constant dense<0.000000e+00> : vector<8x128xf32>
    %13 = tpu.matmul %12, %11, %cst_8 {dimension_numbers = #tpu.dot_dimension_numbers<[1], [0], [0], [1], [0, 0, 1, 1], [], []>} : vector<8x8xf32>, vector<8x128xf32>, vector<8x128xf32> -> vector<8x128xf32>
    %c0_9 = arith.constant 0 : index
    %c0_10 = arith.constant 0 : index
    %14 = vector.load %arg6[%c0_9, %c0_10] : memref<8x128xf32, #tpu.memory_space<vmem>>, vector<8x128xf32>
    tpu.vector_store %arg6[%c0_9, %c0_10], %13 {strides = array<i32>} : memref<8x128xf32, #tpu.memory_space<vmem>>, vector<8x128xf32>,
    %c0_i32 = arith.constant 0 : i32
    %15 = arith.cmpi eq, %arg1, %c0_i32 : i32
    %16 = arith.extui %15 : i1 to i32
    %c0_i32_11 = arith.constant 0 : i32
    %17 = arith.cmpi ne, %16, %c0_i32_11 : i32
    scf.if %17 {
      %cst_24 = arith.constant 0.000000e+00 : f32
      %39 = vector.broadcast %cst_24 : f32 to vector<8x1xf32>
      %c0_25 = arith.constant 0 : index
      %c0_26 = arith.constant 0 : index
      %40 = vector.load %arg7[%c0_25, %c0_26] : memref<8x1xf32, #tpu.memory_space<vmem>>, vector<8x1xf32>
      tpu.vector_store %arg7[%c0_25, %c0_26], %39 {strides = array<i32>} : memref<8x1xf32, #tpu.memory_space<vmem>>, vector<8x1xf32>,
      %cst_27 = arith.constant 0.000000e+00 : f32
      %41 = vector.broadcast %cst_27 : f32 to vector<8x1xf32>
      %c0_28 = arith.constant 0 : index
      %c0_29 = arith.constant 0 : index
      %42 = vector.load %arg8[%c0_28, %c0_29] : memref<8x1xf32, #tpu.memory_space<vmem>>, vector<8x1xf32>
      tpu.vector_store %arg8[%c0_28, %c0_29], %41 {strides = array<i32>} : memref<8x1xf32, #tpu.memory_space<vmem>>, vector<8x1xf32>,
    } else {
    }
    %c1_i32 = arith.constant 1 : i32
    %18 = arith.muli %arg0, %c1_i32 : i32
    %19 = arith.addi %18, %arg1 : i32
    %c128_i32 = arith.constant 128 : i32
    %20 = arith.muli %19, %c128_i32 : i32
    %21 = tpu.iota {dimensions = array<i32: 1>} : vector<8x128xi32>
    %22 = vector.broadcast %20 : i32 to vector<8x128xi32>
    %23 = arith.addi %21, %22 : vector<8x128xi32>
    %c128_i32_12 = arith.constant 128 : i32
    %24 = vector.broadcast %c128_i32_12 : i32 to vector<8x128xi32>
    %25 = arith.cmpi slt, %23, %24 : vector<8x128xi32>
    %cst_13 = arith.constant 0.000000e+00 : f32
    %26 = vector.broadcast %cst_13 : f32 to vector<8x128xf32>
    %27 = arith.select %25, %13, %26 : vector<8x128xi1>, vector<8x128xf32>
    %c0_14 = arith.constant 0 : index
    %c0_15 = arith.constant 0 : index
    %28 = vector.load %arg7[%c0_14, %c0_15] : memref<8x1xf32, #tpu.memory_space<vmem>>, vector<8x1xf32>
    %cst_16 = arith.constant dense<0.000000e+00> : vector<8xf32>
    %29 = vector.multi_reduction <add>, %27, %cst_16 [1] : vector<8x128xf32> to vector<8xf32>
    %30 = vector.shape_cast %29 : vector<8xf32> to vector<8x1xf32>
    %31 = arith.addf %28, %30 : vector<8x1xf32>
    %c0_17 = arith.constant 0 : index
    %c0_18 = arith.constant 0 : index
    %32 = vector.load %arg7[%c0_17, %c0_18] : memref<8x1xf32, #tpu.memory_space<vmem>>, vector<8x1xf32>
    tpu.vector_store %arg7[%c0_17, %c0_18], %31 {strides = array<i32>} : memref<8x1xf32, #tpu.memory_space<vmem>>, vector<8x1xf32>,
    %c0_19 = arith.constant 0 : index
    %c0_20 = arith.constant 0 : index
    %33 = vector.load %arg8[%c0_19, %c0_20] : memref<8x1xf32, #tpu.memory_space<vmem>>, vector<8x1xf32>
    %34 = arith.mulf %27, %27 : vector<8x128xf32>
    %cst_21 = arith.constant dense<0.000000e+00> : vector<8xf32>
    %35 = vector.multi_reduction <add>, %34, %cst_21 [1] : vector<8x128xf32> to vector<8xf32>
    %36 = vector.shape_cast %35 : vector<8xf32> to vector<8x1xf32>
    %37 = arith.addf %33, %36 : vector<8x1xf32>
    %c0_22 = arith.constant 0 : index
    %c0_23 = arith.constant 0 : index
    %38 = vector.load %arg8[%c0_22, %c0_23] : memref<8x1xf32, #tpu.memory_space<vmem>>, vector<8x1xf32>
    tpu.vector_store %arg8[%c0_22, %c0_23], %37 {strides = array<i32>} : memref<8x1xf32, #tpu.memory_space<vmem>>, vector<8x1xf32>,
    return
  }
  func.func @transform_0(%arg0: i32, %arg1: i32) -> (i32, i32) {
    %c1_i32 = arith.constant 1 : i32
    %0 = arith.muli %arg0, %c1_i32 : i32
    %1 = arith.addi %0, %arg1 : i32
    %c0_i32 = arith.constant 0 : i32
    %c0_i32_0 = arith.constant 0 : i32
    return %c0_i32, %1 : i32, i32
  }
  func.func @transform_1(%arg0: i32, %arg1: i32) -> (i32, i32) {
    %c0_i32 = arith.constant 0 : i32
    %c0_i32_0 = arith.constant 0 : i32
    %c0_i32_1 = arith.constant 0 : i32
    return %c0_i32, %c0_i32_0 : i32, i32
  }
  func.func @transform_2(%arg0: i32, %arg1: i32) -> (i32, i32) {
    %c0_i32 = arith.constant 0 : i32
    %c0_i32_0 = arith.constant 0 : i32
    %c0_i32_1 = arith.constant 0 : i32
    return %c0_i32, %c0_i32_0 : i32, i32
  }
  func.func @transform_3(%arg0: i32, %arg1: i32) -> (i32, i32) {
    %c0_i32 = arith.constant 0 : i32
    %c0_i32_0 = arith.constant 0 : i32
    %c0_i32_1 = arith.constant 0 : i32
    return %c0_i32, %c0_i32_0 : i32, i32
  }
  func.func @transform_4(%arg0: i32, %arg1: i32) -> (i32, i32) {
    %c1_i32 = arith.constant 1 : i32
    %0 = arith.muli %arg0, %c1_i32 : i32
    %1 = arith.addi %0, %arg1 : i32
    %c0_i32 = arith.constant 0 : i32
    %c0_i32_0 = arith.constant 0 : i32
    return %c0_i32, %1 : i32, i32
  }
  func.func @transform_5(%arg0: i32, %arg1: i32) -> (i32, i32) {
    %c0_i32 = arith.constant 0 : i32
    %c0_i32_0 = arith.constant 0 : i32
    return %arg0, %c0_i32 : i32, i32
  }
  func.func @transform_6(%arg0: i32, %arg1: i32) -> (i32, i32) {
    %c0_i32 = arith.constant 0 : i32
    %c0_i32_0 = arith.constant 0 : i32
    return %arg0, %c0_i32 : i32, i32
  }
}

module attributes {stable_mosaic.version = 11 : i64} {
  func.func @_bn2_lrelu_kernel(%arg0: i32, %arg1: i32, %arg2: memref<8x128xf32, #tpu.memory_space<vmem>>, %arg3: memref<8x1xf32, #tpu.memory_space<vmem>>, %arg4: memref<8x1xf32, #tpu.memory_space<vmem>>, %arg5: memref<8x128xf32, #tpu.memory_space<vmem>>) attributes {dimension_semantics = [#tpu.dimension_semantics<parallel>, #tpu.dimension_semantics<parallel>], iteration_bounds = array<i64: 2, 1>, scalar_prefetch = 0 : i64, scratch_operands = 0 : i64, tpu.core_type = #tpu.core_type<tc>, window_params = [{transform_indices = @transform_0, window_bounds = array<i64: 8, 128>}, {pipeline_mode = #tpu.pipeline_mode<synchronous>, transform_indices = @transform_1, window_bounds = array<i64: 8, 1>}, {pipeline_mode = #tpu.pipeline_mode<synchronous>, transform_indices = @transform_2, window_bounds = array<i64: 8, 1>}, {transform_indices = @transform_3, window_bounds = array<i64: 8, 128>}]} {
    %c0 = arith.constant 0 : index
    %c0_0 = arith.constant 0 : index
    %0 = vector.load %arg2[%c0, %c0_0] : memref<8x128xf32, #tpu.memory_space<vmem>>, vector<8x128xf32>
    %c0_1 = arith.constant 0 : index
    %c0_2 = arith.constant 0 : index
    %1 = vector.load %arg3[%c0_1, %c0_2] : memref<8x1xf32, #tpu.memory_space<vmem>>, vector<8x1xf32>
    %2 = vector.broadcast %1 : vector<8x1xf32> to vector<8x128xf32>
    %3 = arith.mulf %0, %2 : vector<8x128xf32>
    %c0_3 = arith.constant 0 : index
    %c0_4 = arith.constant 0 : index
    %4 = vector.load %arg4[%c0_3, %c0_4] : memref<8x1xf32, #tpu.memory_space<vmem>>, vector<8x1xf32>
    %5 = vector.broadcast %4 : vector<8x1xf32> to vector<8x128xf32>
    %6 = arith.addf %3, %5 : vector<8x128xf32>
    %cst = arith.constant 0.000000e+00 : f32
    %7 = vector.broadcast %cst : f32 to vector<8x128xf32>
    %8 = arith.cmpf oge, %6, %7 : vector<8x128xf32>
    %cst_5 = arith.constant 2.000000e-01 : f32
    %9 = vector.broadcast %cst_5 : f32 to vector<8x128xf32>
    %10 = arith.mulf %9, %6 : vector<8x128xf32>
    %11 = arith.select %8, %6, %10 : vector<8x128xi1>, vector<8x128xf32>
    %c0_6 = arith.constant 0 : index
    %c0_7 = arith.constant 0 : index
    %12 = vector.load %arg5[%c0_6, %c0_7] : memref<8x128xf32, #tpu.memory_space<vmem>>, vector<8x128xf32>
    tpu.vector_store %arg5[%c0_6, %c0_7], %11 {strides = array<i32>} : memref<8x128xf32, #tpu.memory_space<vmem>>, vector<8x128xf32>,
    return
  }
  func.func @transform_0(%arg0: i32, %arg1: i32) -> (i32, i32) {
    %c1_i32 = arith.constant 1 : i32
    %0 = arith.muli %arg0, %c1_i32 : i32
    %1 = arith.addi %0, %arg1 : i32
    %c0_i32 = arith.constant 0 : i32
    %c0_i32_0 = arith.constant 0 : i32
    return %c0_i32, %1 : i32, i32
  }
  func.func @transform_1(%arg0: i32, %arg1: i32) -> (i32, i32) {
    %c0_i32 = arith.constant 0 : i32
    %c0_i32_0 = arith.constant 0 : i32
    %c0_i32_1 = arith.constant 0 : i32
    return %c0_i32, %c0_i32_0 : i32, i32
  }
  func.func @transform_2(%arg0: i32, %arg1: i32) -> (i32, i32) {
    %c0_i32 = arith.constant 0 : i32
    %c0_i32_0 = arith.constant 0 : i32
    %c0_i32_1 = arith.constant 0 : i32
    return %c0_i32, %c0_i32_0 : i32, i32
  }
  func.func @transform_3(%arg0: i32, %arg1: i32) -> (i32, i32) {
    %c1_i32 = arith.constant 1 : i32
    %0 = arith.muli %arg0, %c1_i32 : i32
    %1 = arith.addi %0, %arg1 : i32
    %c0_i32 = arith.constant 0 : i32
    %c0_i32_0 = arith.constant 0 : i32
    return %c0_i32, %1 : i32, i32
  }
}

</mosaic_0001>

<llo_original>
// kernel: mul.11
$region0: #{mul.11}
  #allocation0 [shape = 's32[1]{0}', space=sflag, size = 0x4, scoped, tag = 'scoped memory for mul.11']
  %s0 = inlined_call_operand.vmem [shape: f32[8,1], index: 0, kind: input, shape index: {}]
  %s1 = inlined_call_operand.vmem [shape: f32[8,1], index: 1, kind: input, shape index: {}]
  %s2 = inlined_call_operand.vmem [shape: f32[8,1], index: 2, kind: output, shape index: {}]
  %v3 = vld [vmem:[%s0] sm:$0xff]
  %v4 = vld [vmem:[%s1] sm:$0xff]
  %5 = xla_tuple %v3, %v4
  %6 = xla_tuple %5
  %v7 = vmul.f32 %v3, %v4
  %8 = xla_tuple %v7
  %9 = vst [vmem:[%s2] sm:$0xff] %v7

// kernel: downblockpatch_forward.4
$region0: #{downblockpatch_forward.4}
  #allocation0 [shape = 'u32[]', space=smem, size = 0x4, offset = 0x4, fixed_abs, tag = 'smem constant byte address 0x4 - core index']
  #allocation1 [shape = 'u32[72,128]{1,0:T(1,128)}', space=vmem, size = 0x9000, scoped, tag = 'internal scratch']
  %s0 = inlined_call_operand.vmem [shape: f32[8,256], index: 0, kind: input, shape index: {}]
  %s1 = inlined_call_operand.vmem [shape: f32[8,1], index: 1, kind: input, shape index: {}]
  %s2 = inlined_call_operand.vmem [shape: f32[8,1], index: 2, kind: input, shape index: {}]
  %s3 = inlined_call_operand.vmem [shape: f32[8,8], index: 3, kind: input, shape index: {}]
  %s4 = inlined_call_operand.vmem [shape: f32[8,256], index: 4, kind: output, shape index: {0}]
  %s5 = inlined_call_operand.vmem [shape: f32[16,1], index: 5, kind: output, shape index: {1}]
  %s6 = inlined_call_operand.vmem [shape: f32[16,1], index: 6, kind: output, shape index: {2}]
  %7 = xla_tuple %s4, %s5, %s6
  %s8 = sld [smem:[#allocation0]]
  $region69: #{downblockpatch_forward.4} parent=0
    _
  %s10 = ssub.s32 1, %s8
  %s11 = scalar_select 0, %s10, %s8
  loop: start=0, step=1, limit=4
  $region2: #{downblockpatch_forward.4} parent=0 // loop_pre_header
    _
  $region3: #{downblockpatch_forward.4} parent=0 // loop_header
    %s13 = sphi 0, %s17
    %p14 = scmp.ge.s32.totalorder %s13, 4
    %s20 = sphi 0, %s32
    %s21 = sphi 0, %s28
    %s22 = sphi 0, %s20
    %s23 = sphi 0, %s21
    %s24 = sphi 0, %s22
    %s25 = sphi 0, %s23
    %s37 = sphi 0, %s39
    %s40 = sphi 0, %s37
    %s41 = sphi 0, %s40
    %s57 = sphi 0, %s41
    %s61 = sphi 0, %s61
    %s63 = sphi 0, %s61
    %s64 = sphi 0, %s63
    %s78 = sphi 0, %s64
    %s82 = sphi 0, %s82
    %s84 = sphi 0, %s82
    %s85 = sphi 0, %s84
    %s99 = sphi 0, %s85
    %s103 = sphi 0, %s103
    %s105 = sphi 0, %s103
    %s106 = sphi 0, %s105
    %s120 = sphi 0, %s106
    %s128 = sphi 0, %s130
    %s131 = sphi 0, %s128
    %s132 = sphi 0, %s131
    %s148 = sphi 0, %s132
    %s154 = sphi 0, %s156
    %s157 = sphi 0, %s154
    %s158 = sphi 0, %s157
    %s174 = sphi 0, %s158
    %s180 = sphi 0, %s182
    %s183 = sphi 0, %s180
    %s184 = sphi 0, %s183
    %s200 = sphi 0, %s184
  $region4: #{downblockpatch_forward.4} parent=0 // loop_header_branch
    %16 = sbr.rel (%p14) target = $region8
  $region5: #{downblockpatch_forward.4} parent=0 // loop_body
    %s18 = ssub.s32 %s13, 1
    %s19 = ssub.s32 %s13, 2
    %s26 = sadd.s32 1, %s21
    %p27 = scmp.ge.s32.totalorder %s26, 1
    %s28 = scalar_select %p27, 0, %s26
    %s29 = sadd.s32 1, %s20
    %s30 = scalar_select %p27, %s29, %s20
    %p31 = scmp.ge.s32.totalorder %s30, 2
    %s32 = scalar_select %p31, 0, %s30
    %s33 = sadd.s32 %s20, %s21
    %s34 = sadd.s32 %s32, %s28
    %s35 = ssub.s32 %s33, %s34
    %p36 = scmp.eq.s32.totalorder %s35, 0
    %s38 = sadd.s32 %s37, 1
    %s39 = scalar_select %p36, %s37, %s38
    %p42 = pneg %p36
    %p43 = scmp.eq.s32.totalorder %s13, 1
    %p44 = por %p42, %p43
    %p45 = scmp.ne.s32.totalorder %s37, %s40
    %p46 = scmp.eq.s32.totalorder %s13, 0
    %p47 = por %p45, %p46
    %p48 = scmp.ne.s32.totalorder %s37, %s40
    %p49 = scmp.eq.s32.totalorder %s18, 1
    %p50 = por %p48, %p49
    %p51 = scmp.ne.s32.totalorder %s40, %s41
    %p52 = scmp.eq.s32.totalorder %s18, 0
    %p53 = por %p51, %p52
    %p54 = scmp.ne.s32.totalorder %s40, %s41
    %p55 = scmp.eq.s32.totalorder %s19, 1
    %p56 = por %p54, %p55
    %p58 = scmp.ne.s32.totalorder %s41, %s57
    %p59 = scmp.eq.s32.totalorder %s19, 0
    %p60 = por %p58, %p59
    %s62 = sadd.s32 %s61, 1
    %p65 = scmp.eq.s32.totalorder %s13, 1
    %p66 = scmp.ne.s32.totalorder %s61, %s63
    %p67 = scmp.eq.s32.totalorder %s13, 0
    %p68 = por %p66, %p67
    %p69 = scmp.ne.s32.totalorder %s61, %s63
    %p70 = scmp.eq.s32.totalorder %s18, 1
    %p71 = por %p69, %p70
    %p72 = scmp.ne.s32.totalorder %s63, %s64
    %p73 = scmp.eq.s32.totalorder %s18, 0
    %p74 = por %p72, %p73
    %p75 = scmp.ne.s32.totalorder %s63, %s64
    %p76 = scmp.eq.s32.totalorder %s19, 1
    %p77 = por %p75, %p76
    %p79 = scmp.ne.s32.totalorder %s64, %s78
    %p80 = scmp.eq.s32.totalorder %s19, 0
    %p81 = por %p79, %p80
    %s83 = sadd.s32 %s82, 1
    %p86 = scmp.eq.s32.totalorder %s13, 1
    %p87 = scmp.ne.s32.totalorder %s82, %s84
    %p88 = scmp.eq.s32.totalorder %s13, 0
    %p89 = por %p87, %p88
    %p90 = scmp.ne.s32.totalorder %s82, %s84
    %p91 = scmp.eq.s32.totalorder %s18, 1
    %p92 = por %p90, %p91
    %p93 = scmp.ne.s32.totalorder %s84, %s85
    %p94 = scmp.eq.s32.totalorder %s18, 0
    %p95 = por %p93, %p94
    %p96 = scmp.ne.s32.totalorder %s84, %s85
    %p97 = scmp.eq.s32.totalorder %s19, 1
    %p98 = por %p96, %p97
    %p100 = scmp.ne.s32.totalorder %s85, %s99
    %p101 = scmp.eq.s32.totalorder %s19, 0
    %p102 = por %p100, %p101
    %s104 = sadd.s32 %s103, 1
    %p107 = scmp.eq.s32.totalorder %s13, 1
    %p108 = scmp.ne.s32.totalorder %s103, %s105
    %p109 = scmp.eq.s32.totalorder %s13, 0
    %p110 = por %p108, %p109
    %p111 = scmp.ne.s32.totalorder %s103, %s105
    %p112 = scmp.eq.s32.totalorder %s18, 1
    %p113 = por %p111, %p112
    %p114 = scmp.ne.s32.totalorder %s105, %s106
    %p115 = scmp.eq.s32.totalorder %s18, 0
    %p116 = por %p114, %p115
    %p117 = scmp.ne.s32.totalorder %s105, %s106
    %p118 = scmp.eq.s32.totalorder %s19, 1
    %p119 = por %p117, %p118
    %p121 = scmp.ne.s32.totalorder %s106, %s120
    %p122 = scmp.eq.s32.totalorder %s19, 0
    %p123 = por %p121, %p122
    %s124 = sadd.s32 %s20, %s21
    %s125 = sadd.s32 %s32, %s28
    %s126 = ssub.s32 %s124, %s125
    %p127 = scmp.eq.s32.totalorder %s126, 0
    %s129 = sadd.s32 %s128, 1
    %s130 = scalar_select %p127, %s128, %s129
    %p133 = pneg %p127
    %p134 = scmp.eq.s32.totalorder %s13, 1
    %p135 = por %p133, %p134
    %p136 = scmp.ne.s32.totalorder %s128, %s131
    %p137 = scmp.eq.s32.totalorder %s13, 0
    %p138 = por %p136, %p137
    %p139 = scmp.ne.s32.totalorder %s128, %s131
    %p140 = scmp.eq.s32.totalorder %s18, 1
    %p141 = por %p139, %p140
    %p142 = scmp.ne.s32.totalorder %s131, %s132
    %p143 = scmp.eq.s32.totalorder %s18, 0
    %p144 = por %p142, %p143
    %p145 = scmp.ne.s32.totalorder %s131, %s132
    %p146 = scmp.eq.s32.totalorder %s19, 1
    %p147 = por %p145, %p146
    %p149 = scmp.ne.s32.totalorder %s132, %s148
    %p150 = scmp.eq.s32.totalorder %s19, 0
    %p151 = por %p149, %p150
    %s152 = ssub.s32 %s20, %s32
    %p153 = scmp.eq.s32.totalorder %s152, 0
    %s155 = sadd.s32 %s154, 1
    %s156 = scalar_select %p153, %s154, %s155
    %p159 = pneg %p153
    %p160 = scmp.eq.s32.totalorder %s13, 1
    %p161 = por %p159, %p160
    %p162 = scmp.ne.s32.totalorder %s154, %s157
    %p163 = scmp.eq.s32.totalorder %s13, 0
    %p164 = por %p162, %p163
    %p165 = scmp.ne.s32.totalorder %s154, %s157
    %p166 = scmp.eq.s32.totalorder %s18, 1
    %p167 = por %p165, %p166
    %p168 = scmp.ne.s32.totalorder %s157, %s158
    %p169 = scmp.eq.s32.totalorder %s18, 0
    %p170 = por %p168, %p169
    %p171 = scmp.ne.s32.totalorder %s157, %s158
    %p172 = scmp.eq.s32.totalorder %s19, 1
    %p173 = por %p171, %p172
    %p175 = scmp.ne.s32.totalorder %s158, %s174
    %p176 = scmp.eq.s32.totalorder %s19, 0
    %p177 = por %p175, %p176
    %s178 = ssub.s32 %s20, %s32
    %p179 = scmp.eq.s32.totalorder %s178, 0
    %s181 = sadd.s32 %s180, 1
    %s182 = scalar_select %p179, %s180, %s181
    %p185 = pneg %p179
    %p186 = scmp.eq.s32.totalorder %s13, 1
    %p187 = por %p185, %p186
    %p188 = scmp.ne.s32.totalorder %s180, %s183
    %p189 = scmp.eq.s32.totalorder %s13, 0
    %p190 = por %p188, %p189
    %p191 = scmp.ne.s32.totalorder %s180, %s183
    %p192 = scmp.eq.s32.totalorder %s18, 1
    %p193 = por %p191, %p192
    %p194 = scmp.ne.s32.totalorder %s183, %s184
    %p195 = scmp.eq.s32.totalorder %s18, 0
    %p196 = por %p194, %p195
    %p197 = scmp.ne.s32.totalorder %s183, %s184
    %p198 = scmp.eq.s32.totalorder %s19, 1
    %p199 = por %p197, %p198
    %p201 = scmp.ne.s32.totalorder %s184, %s200
    %p202 = scmp.eq.s32.totalorder %s19, 0
    %p203 = por %p201, %p202
    %p204 = scmp.le.s32.totalorder 1, %s13
    %p205 = scmp.lt.s32.totalorder %s13, 3
    %p206 = pnand %p204, %p205
    %p207 = pneg %p206
    // Predicated region
    $region9: #{downblockpatch_forward.4} parent=5 // pred_check
      _
    $region10: #{downblockpatch_forward.4} parent=5 // pred_check_branch
      %209 = sbr.rel (%p206) target = $region12
    $region11: #{downblockpatch_forward.4} parent=5 // pred_region
      %s210 = ssub.s32 %s13, 1
      // Predicated region
      $region13: #{downblockpatch_forward.4} parent=11 // pred_check
        %p211 = pneg %p74
      $region14: #{downblockpatch_forward.4} parent=11 // pred_check_branch
        %213 = sbr.rel (%p211) target = $region16
      $region15: #{downblockpatch_forward.4} parent=11 // pred_region
        _
      $region16: #{downblockpatch_forward.4} parent=11 // pred_fallthru
        _
      // Predicated region
      $region17: #{downblockpatch_forward.4} parent=11 // pred_check
        %p214 = pneg %p95
      $region18: #{downblockpatch_forward.4} parent=11 // pred_check_branch
        %216 = sbr.rel (%p214) target = $region20
      $region19: #{downblockpatch_forward.4} parent=11 // pred_region
        _
      $region20: #{downblockpatch_forward.4} parent=11 // pred_fallthru
        _
      // Predicated region
      $region21: #{downblockpatch_forward.4} parent=11 // pred_check
        %p217 = pneg %p116
      $region22: #{downblockpatch_forward.4} parent=11 // pred_check_branch
        %219 = sbr.rel (%p217) target = $region24
      $region23: #{downblockpatch_forward.4} parent=11 // pred_region
        _
      $region24: #{downblockpatch_forward.4} parent=11 // pred_fallthru
        _
    $region12: #{downblockpatch_forward.4} parent=5 // pred_fallthru
      _
    %p220 = scmp.lt.s32.totalorder %s13, 2
    // Predicated region
    $region25: #{downblockpatch_forward.4} parent=5 // pred_check
      %p221 = pneg %p220
    $region26: #{downblockpatch_forward.4} parent=5 // pred_check_branch
      %223 = sbr.rel (%p221) target = $region28
    $region27: #{downblockpatch_forward.4} parent=5 // pred_region
      // Predicated region
      $region29: #{downblockpatch_forward.4} parent=27 // pred_check
        %p224 = pneg %p47
      $region30: #{downblockpatch_forward.4} parent=27 // pred_check_branch
        %226 = sbr.rel (%p224) target = $region32
      $region31: #{downblockpatch_forward.4} parent=27 // pred_region
        %s227 = sadd.s32 %s20, %s21
        %p228 = scmp.lt.s32.totalorder %s227, 1
        %s229 = scalar_select %p228, %s227, 1
        %s230 = smul.addr %s229, 8
        %s231 = scalar_lea.vmem %s0, %s230
        %s232 = sadd.s32 %s20, %s21
      $region32: #{downblockpatch_forward.4} parent=27 // pred_fallthru
        _
    $region28: #{downblockpatch_forward.4} parent=5 // pred_fallthru
      _
    %p233 = scmp.le.s32.totalorder 1, %s13
    %p234 = scmp.lt.s32.totalorder %s13, 3
    %p235 = pnand %p233, %p234
    %p236 = pneg %p235
    // Predicated region
    $region33: #{downblockpatch_forward.4} parent=5 // pred_check
      _
    $region34: #{downblockpatch_forward.4} parent=5 // pred_check_branch
      %238 = sbr.rel (%p235) target = $region36
    $region35: #{downblockpatch_forward.4} parent=5 // pred_region
      %s239 = ssub.s32 %s13, 1
      %s240 = sadd.s32 %s22, %s23
      %p241 = scmp.lt.s32.totalorder %s240, 1
      %s242 = scalar_select %p241, %s240, 1
      %s243 = smul.addr %s242, 8
      %s244 = scalar_lea.vmem %s0, %s243
      %p245 = pneg %p53
      %p246 = pneg %p50
      %p247 = pneg %p74
      %p248 = pneg %p71
      %p249 = pneg %p95
      %p250 = pneg %p92
      %p251 = pneg %p116
      %p252 = pneg %p113
      %p253 = pneg %p144
      %p254 = pneg %p141
      %s255 = sadd.s32 %s22, %s23
      %p256 = scmp.lt.s32.totalorder %s255, 1
      %s257 = scalar_select %p256, %s255, 1
      %s258 = smul.addr %s257, 8
      %s259 = scalar_lea.vmem %s4, %s258
      %p260 = pneg %p170
      %p261 = pneg %p167
      %p262 = scmp.lt.s32.totalorder %s22, 1
      %s263 = scalar_select %p262, %s22, 1
      %s264 = smul.addr %s263, 8
      %s265 = scalar_lea.vmem %s5, %s264
      %p266 = pneg %p196
      %p267 = pneg %p193
      %p268 = scmp.lt.s32.totalorder %s22, 1
      %s269 = scalar_select %p268, %s22, 1
      %s270 = smul.addr %s269, 8
      %s271 = scalar_lea.vmem %s6, %s270
      %s272 = sadd.s32 %s22, %s23
      %p273 = scmp.lt.s32.totalorder %s272, 1
      %s274 = scalar_select %p273, %s272, 1
      %s275 = smul.addr %s274, 8
      %s276 = scalar_lea.vmem %s0, %s275
      %s277 = sadd.s32 %s22, %s23
      %s278 = sadd.s32 %s22, %s23
      %p279 = scmp.lt.s32.totalorder %s278, 1
      %s280 = scalar_select %p279, %s278, 1
      %s281 = smul.addr %s280, 8
      %s282 = scalar_lea.vmem %s4, %s281
      %s283 = sadd.s32 %s22, %s23
      %p284 = scmp.lt.s32.totalorder %s22, 1
      %s285 = scalar_select %p284, %s22, 1
      %s286 = smul.addr %s285, 8
      %s287 = scalar_lea.vmem %s5, %s286
      %p288 = scmp.lt.s32.totalorder %s22, 1
      %s289 = scalar_select %p288, %s22, 1
      %s290 = smul.addr %s289, 8
      %s291 = scalar_lea.vmem %s6, %s290
      %v292 = vld [vmem:[%s276] sm:$0xff]
      %v293 = vld [vmem:[%s1] sm:$0xff]
      %295 = vset.pattern.permute.xlu0 0
      %296 = vperm.xlu0 %295, %v293
      %v297 = vpop.permute.xlu0 %296
      %v299 = vmul.f32 %v292, %v297
      %v300 = vld [vmem:[%s2] sm:$0xff]
      %302 = vset.pattern.permute.xlu0 0
      %303 = vperm.xlu0 %302, %v300
      %v304 = vpop.permute.xlu0 %303
      %v306 = vadd.f32 %v299, %v304
      %vm307 = vcmp.ge.f32.partialorder %v306, 0.0
      %v308 = vmul.f32 %v306, 0.2
      %v309 = vsel %vm307, %v306, %v308
      %v310 = vld [vmem:[%s3] sm:$0xff]
      %vm311 = vcmask 64512
      %v313 = vsel %vm311, %v310, 0
      %315 = vmatpush.msra.mxu0 0.0
      %316 = vmatpush.msra.mxu0 0.0
      %317 = vmatpush.msra.mxu0 0.0
      %318 = vmatpush.msra.mxu0 0.0
      %319 = vmatpush.msra.mxu0 0.0
      %320 = vmatpush.msra.mxu0 0.0
      %321 = vmatpush.msra.mxu0 0.0
      %322 = vmatpush.msra.mxu0 0.0
      %323 = vmatpush.msra.mxu0 0.0
      %324 = vmatpush.msra.mxu0 0.0
      %325 = vmatpush.msra.mxu0 0.0
      %326 = vmatpush.msra.mxu0 0.0
      %327 = vmatpush.msra.mxu0 0.0
      %328 = vmatpush.msra.mxu0 0.0
      %329 = vmatpush.msra.mxu0 0.0
      %330 = vmatpush.msra.mxu0 %v309
      %331 = vmatmul.f32.gmra.mxu0 %v313
      %v332 = vpop.f32.mrf.mxu0
      %v333 = vadd.f32 0.0, %v332
      %334 = vdwg.mxu0
      %335 = vst [vmem:[%s282] sm:$0xff] %v333
      %p336 = scmp.eq.s32.totalorder %s23, 0
      // Predicated region
      $region37: #{downblockpatch_forward.4} parent=35 // pred_check
        %p337 = pneg %p336
      $region38: #{downblockpatch_forward.4} parent=35 // pred_check_branch
        %339 = sbr.rel (%p337) target = $region40
      $region39: #{downblockpatch_forward.4} parent=35 // pred_region
        %vm340 = vcmask 7168
        %341 = vst.msk [vmem:[%s287] sm:$0xff] %vm340, 0.0
        %342 = vst.msk [vmem:[%s291] sm:$0xff] %vm340, 0.0
      $region40: #{downblockpatch_forward.4} parent=35 // pred_fallthru
        _
      %s343 = sadd.s32 %s22, %s23
      %s344 = smul.u32 %s343, 128
      %v345 = vlaneseq
      %v346 = vand.u32 %v345, 127
      %v347 = vstv %s344
      %v348 = vadd.s32 %v346, %v347
      %vm349 = vcmp.lt.s32.totalorder %v348, 128
      %v350 = vsel %vm349, %v333, 0.0
      %v351 = vld [vmem:[%s287] sm:$0xff]
      %352 = vadd.xlane.f32.xlu0 %v350
      %v353 = vpop.xlane.xlu0 %352
      %v354 = vadd.f32 %v351, %v353
      %vm355 = vcmask 7168
      %356 = vst.msk [vmem:[%s287] sm:$0xff] %vm355, %v354
      %v357 = vld [vmem:[%s291] sm:$0xff]
      %v358 = vmul.f32 %v350, %v350
      %359 = vadd.xlane.f32.xlu0 %v358
      %v360 = vpop.xlane.xlu0 %359
      %v361 = vadd.f32 %v357, %v360
      %362 = vst.msk [vmem:[%s291] sm:$0xff] %vm355, %v361
      %s363 = sadd.s32 %s22, %s23
      %p364 = scmp.lt.s32.totalorder %s363, 1
      %s365 = scalar_select %p364, %s363, 1
      %s366 = smul.addr %s365, 8
      %s367 = scalar_lea.vmem %s4, %s366
      %p368 = scmp.lt.s32.totalorder %s22, 1
      %s369 = scalar_select %p368, %s22, 1
      %s370 = smul.addr %s369, 8
      %s371 = scalar_lea.vmem %s5, %s370
      %p372 = scmp.lt.s32.totalorder %s22, 1
      %s373 = scalar_select %p372, %s22, 1
      %s374 = smul.addr %s373, 8
      %s375 = scalar_lea.vmem %s6, %s374
      // Predicated region
      $region41: #{downblockpatch_forward.4} parent=35 // pred_check
        %p376 = pneg %p141
      $region42: #{downblockpatch_forward.4} parent=35 // pred_check_branch
        %378 = sbr.rel (%p376) target = $region44
      $region43: #{downblockpatch_forward.4} parent=35 // pred_region
        %s379 = sadd.s32 %s22, %s23
      $region44: #{downblockpatch_forward.4} parent=35 // pred_fallthru
        _
      // Predicated region
      $region45: #{downblockpatch_forward.4} parent=35 // pred_check
        %p380 = pneg %p167
      $region46: #{downblockpatch_forward.4} parent=35 // pred_check_branch
        %382 = sbr.rel (%p380) target = $region48
      $region47: #{downblockpatch_forward.4} parent=35 // pred_region
        _
      $region48: #{downblockpatch_forward.4} parent=35 // pred_fallthru
        _
      // Predicated region
      $region49: #{downblockpatch_forward.4} parent=35 // pred_check
        %p383 = pneg %p193
      $region50: #{downblockpatch_forward.4} parent=35 // pred_check_branch
        %385 = sbr.rel (%p383) target = $region52
      $region51: #{downblockpatch_forward.4} parent=35 // pred_region
        _
      $region52: #{downblockpatch_forward.4} parent=35 // pred_fallthru
        _
    $region36: #{downblockpatch_forward.4} parent=5 // pred_fallthru
      _
    %p386 = scmp.le.s32.totalorder 2, %s13
    // Predicated region
    $region53: #{downblockpatch_forward.4} parent=5 // pred_check
      %p387 = pneg %p386
    $region54: #{downblockpatch_forward.4} parent=5 // pred_check_branch
      %389 = sbr.rel (%p387) target = $region56
    $region55: #{downblockpatch_forward.4} parent=5 // pred_region
      %s390 = ssub.s32 %s13, 2
      // Predicated region
      $region57: #{downblockpatch_forward.4} parent=55 // pred_check
        %p391 = pneg %p147
      $region58: #{downblockpatch_forward.4} parent=55 // pred_check_branch
        %393 = sbr.rel (%p391) target = $region60
      $region59: #{downblockpatch_forward.4} parent=55 // pred_region
        %s394 = sadd.s32 %s24, %s25
        %p395 = scmp.lt.s32.totalorder %s394, 1
        %s396 = scalar_select %p395, %s394, 1
        %s397 = smul.addr %s396, 8
        %s398 = scalar_lea.vmem %s4, %s397
      $region60: #{downblockpatch_forward.4} parent=55 // pred_fallthru
        _
      // Predicated region
      $region61: #{downblockpatch_forward.4} parent=55 // pred_check
        %p399 = pneg %p173
      $region62: #{downblockpatch_forward.4} parent=55 // pred_check_branch
        %401 = sbr.rel (%p399) target = $region64
      $region63: #{downblockpatch_forward.4} parent=55 // pred_region
        %p402 = scmp.lt.s32.totalorder %s24, 1
        %s403 = scalar_select %p402, %s24, 1
        %s404 = smul.addr %s403, 8
        %s405 = scalar_lea.vmem %s5, %s404
      $region64: #{downblockpatch_forward.4} parent=55 // pred_fallthru
        _
      // Predicated region
      $region65: #{downblockpatch_forward.4} parent=55 // pred_check
        %p406 = pneg %p199
      $region66: #{downblockpatch_forward.4} parent=55 // pred_check_branch
        %408 = sbr.rel (%p406) target = $region68
      $region67: #{downblockpatch_forward.4} parent=55 // pred_region
        %p409 = scmp.lt.s32.totalorder %s24, 1
        %s410 = scalar_select %p409, %s24, 1
        %s411 = smul.addr %s410, 8
        %s412 = scalar_lea.vmem %s6, %s411
      $region68: #{downblockpatch_forward.4} parent=55 // pred_fallthru
        _
    $region56: #{downblockpatch_forward.4} parent=5 // pred_fallthru
      _
  $region6: #{downblockpatch_forward.4} parent=0 // loop_footer
    %s17 = sadd.s32 1, %s13
  $region7: #{downblockpatch_forward.4} parent=0 // loop_footer_branch
    %12 = sbr.rel target = $region3
  $region8: #{downblockpatch_forward.4} parent=0 // loop_exit
    _

// kernel: downblockpatch_forward.5
$region0: #{downblockpatch_forward.5}
  #allocation0 [shape = 'u32[]', space=smem, size = 0x4, offset = 0x4, fixed_abs, tag = 'smem constant byte address 0x4 - core index']
  #allocation1 [shape = 'u32[72,128]{1,0:T(1,128)}', space=vmem, size = 0x9000, scoped, tag = 'internal scratch']
  %s0 = inlined_call_operand.vmem [shape: f32[8,256], index: 0, kind: input, shape index: {}]
  %s1 = inlined_call_operand.vmem [shape: f32[8,1], index: 1, kind: input, shape index: {}]
  %s2 = inlined_call_operand.vmem [shape: f32[8,1], index: 2, kind: input, shape index: {}]
  %s3 = inlined_call_operand.vmem [shape: f32[8,256], index: 3, kind: output, shape index: {}]
  %s4 = sld [smem:[#allocation0]]
  $region45: #{downblockpatch_forward.5} parent=0
    _
  %s6 = ssub.s32 1, %s4
  %s7 = scalar_select 0, %s6, %s4
  loop: start=0, step=1, limit=4
  $region2: #{downblockpatch_forward.5} parent=0 // loop_pre_header
    _
  $region3: #{downblockpatch_forward.5} parent=0 // loop_header
    %s9 = sphi 0, %s13
    %p10 = scmp.ge.s32.totalorder %s9, 4
    %s16 = sphi 0, %s28
    %s17 = sphi 0, %s24
    %s18 = sphi 0, %s16
    %s19 = sphi 0, %s17
    %s20 = sphi 0, %s18
    %s21 = sphi 0, %s19
    %s33 = sphi 0, %s35
    %s36 = sphi 0, %s33
    %s37 = sphi 0, %s36
    %s53 = sphi 0, %s37
    %s57 = sphi 0, %s57
    %s59 = sphi 0, %s57
    %s60 = sphi 0, %s59
    %s74 = sphi 0, %s60
    %s78 = sphi 0, %s78
    %s80 = sphi 0, %s78
    %s81 = sphi 0, %s80
    %s95 = sphi 0, %s81
    %s103 = sphi 0, %s105
    %s106 = sphi 0, %s103
    %s107 = sphi 0, %s106
    %s123 = sphi 0, %s107
  $region4: #{downblockpatch_forward.5} parent=0 // loop_header_branch
    %12 = sbr.rel (%p10) target = $region8
  $region5: #{downblockpatch_forward.5} parent=0 // loop_body
    %s14 = ssub.s32 %s9, 1
    %s15 = ssub.s32 %s9, 2
    %s22 = sadd.s32 1, %s17
    %p23 = scmp.ge.s32.totalorder %s22, 1
    %s24 = scalar_select %p23, 0, %s22
    %s25 = sadd.s32 1, %s16
    %s26 = scalar_select %p23, %s25, %s16
    %p27 = scmp.ge.s32.totalorder %s26, 2
    %s28 = scalar_select %p27, 0, %s26
    %s29 = sadd.s32 %s16, %s17
    %s30 = sadd.s32 %s28, %s24
    %s31 = ssub.s32 %s29, %s30
    %p32 = scmp.eq.s32.totalorder %s31, 0
    %s34 = sadd.s32 %s33, 1
    %s35 = scalar_select %p32, %s33, %s34
    %p38 = pneg %p32
    %p39 = scmp.eq.s32.totalorder %s9, 1
    %p40 = por %p38, %p39
    %p41 = scmp.ne.s32.totalorder %s33, %s36
    %p42 = scmp.eq.s32.totalorder %s9, 0
    %p43 = por %p41, %p42
    %p44 = scmp.ne.s32.totalorder %s33, %s36
    %p45 = scmp.eq.s32.totalorder %s14, 1
    %p46 = por %p44, %p45
    %p47 = scmp.ne.s32.totalorder %s36, %s37
    %p48 = scmp.eq.s32.totalorder %s14, 0
    %p49 = por %p47, %p48
    %p50 = scmp.ne.s32.totalorder %s36, %s37
    %p51 = scmp.eq.s32.totalorder %s15, 1
    %p52 = por %p50, %p51
    %p54 = scmp.ne.s32.totalorder %s37, %s53
    %p55 = scmp.eq.s32.totalorder %s15, 0
    %p56 = por %p54, %p55
    %s58 = sadd.s32 %s57, 1
    %p61 = scmp.eq.s32.totalorder %s9, 1
    %p62 = scmp.ne.s32.totalorder %s57, %s59
    %p63 = scmp.eq.s32.totalorder %s9, 0
    %p64 = por %p62, %p63
    %p65 = scmp.ne.s32.totalorder %s57, %s59
    %p66 = scmp.eq.s32.totalorder %s14, 1
    %p67 = por %p65, %p66
    %p68 = scmp.ne.s32.totalorder %s59, %s60
    %p69 = scmp.eq.s32.totalorder %s14, 0
    %p70 = por %p68, %p69
    %p71 = scmp.ne.s32.totalorder %s59, %s60
    %p72 = scmp.eq.s32.totalorder %s15, 1
    %p73 = por %p71, %p72
    %p75 = scmp.ne.s32.totalorder %s60, %s74
    %p76 = scmp.eq.s32.totalorder %s15, 0
    %p77 = por %p75, %p76
    %s79 = sadd.s32 %s78, 1
    %p82 = scmp.eq.s32.totalorder %s9, 1
    %p83 = scmp.ne.s32.totalorder %s78, %s80
    %p84 = scmp.eq.s32.totalorder %s9, 0
    %p85 = por %p83, %p84
    %p86 = scmp.ne.s32.totalorder %s78, %s80
    %p87 = scmp.eq.s32.totalorder %s14, 1
    %p88 = por %p86, %p87
    %p89 = scmp.ne.s32.totalorder %s80, %s81
    %p90 = scmp.eq.s32.totalorder %s14, 0
    %p91 = por %p89, %p90
    %p92 = scmp.ne.s32.totalorder %s80, %s81
    %p93 = scmp.eq.s32.totalorder %s15, 1
    %p94 = por %p92, %p93
    %p96 = scmp.ne.s32.totalorder %s81, %s95
    %p97 = scmp.eq.s32.totalorder %s15, 0
    %p98 = por %p96, %p97
    %s99 = sadd.s32 %s16, %s17
    %s100 = sadd.s32 %s28, %s24
    %s101 = ssub.s32 %s99, %s100
    %p102 = scmp.eq.s32.totalorder %s101, 0
    %s104 = sadd.s32 %s103, 1
    %s105 = scalar_select %p102, %s103, %s104
    %p108 = pneg %p102
    %p109 = scmp.eq.s32.totalorder %s9, 1
    %p110 = por %p108, %p109
    %p111 = scmp.ne.s32.totalorder %s103, %s106
    %p112 = scmp.eq.s32.totalorder %s9, 0
    %p113 = por %p111, %p112
    %p114 = scmp.ne.s32.totalorder %s103, %s106
    %p115 = scmp.eq.s32.totalorder %s14, 1
    %p116 = por %p114, %p115
    %p117 = scmp.ne.s32.totalorder %s106, %s107
    %p118 = scmp.eq.s32.totalorder %s14, 0
    %p119 = por %p117, %p118
    %p120 = scmp.ne.s32.totalorder %s106, %s107
    %p121 = scmp.eq.s32.totalorder %s15, 1
    %p122 = por %p120, %p121
    %p124 = scmp.ne.s32.totalorder %s107, %s123
    %p125 = scmp.eq.s32.totalorder %s15, 0
    %p126 = por %p124, %p125
    %p127 = scmp.le.s32.totalorder 1, %s9
    %p128 = scmp.lt.s32.totalorder %s9, 3
    %p129 = pnand %p127, %p128
    %p130 = pneg %p129
    // Predicated region
    $region9: #{downblockpatch_forward.5} parent=5 // pred_check
      _
    $region10: #{downblockpatch_forward.5} parent=5 // pred_check_branch
      %132 = sbr.rel (%p129) target = $region12
    $region11: #{downblockpatch_forward.5} parent=5 // pred_region
      %s133 = ssub.s32 %s9, 1
      // Predicated region
      $region13: #{downblockpatch_forward.5} parent=11 // pred_check
        %p134 = pneg %p70
      $region14: #{downblockpatch_forward.5} parent=11 // pred_check_branch
        %136 = sbr.rel (%p134) target = $region16
      $region15: #{downblockpatch_forward.5} parent=11 // pred_region
        _
      $region16: #{downblockpatch_forward.5} parent=11 // pred_fallthru
        _
      // Predicated region
      $region17: #{downblockpatch_forward.5} parent=11 // pred_check
        %p137 = pneg %p91
      $region18: #{downblockpatch_forward.5} parent=11 // pred_check_branch
        %139 = sbr.rel (%p137) target = $region20
      $region19: #{downblockpatch_forward.5} parent=11 // pred_region
        _
      $region20: #{downblockpatch_forward.5} parent=11 // pred_fallthru
        _
    $region12: #{downblockpatch_forward.5} parent=5 // pred_fallthru
      _
    %p140 = scmp.lt.s32.totalorder %s9, 2
    // Predicated region
    $region21: #{downblockpatch_forward.5} parent=5 // pred_check
      %p141 = pneg %p140
    $region22: #{downblockpatch_forward.5} parent=5 // pred_check_branch
      %143 = sbr.rel (%p141) target = $region24
    $region23: #{downblockpatch_forward.5} parent=5 // pred_region
      // Predicated region
      $region25: #{downblockpatch_forward.5} parent=23 // pred_check
        %p144 = pneg %p43
      $region26: #{downblockpatch_forward.5} parent=23 // pred_check_branch
        %146 = sbr.rel (%p144) target = $region28
      $region27: #{downblockpatch_forward.5} parent=23 // pred_region
        %s147 = sadd.s32 %s16, %s17
        %p148 = scmp.lt.s32.totalorder %s147, 1
        %s149 = scalar_select %p148, %s147, 1
        %s150 = smul.addr %s149, 8
        %s151 = scalar_lea.vmem %s0, %s150
        %s152 = sadd.s32 %s16, %s17
      $region28: #{downblockpatch_forward.5} parent=23 // pred_fallthru
        _
    $region24: #{downblockpatch_forward.5} parent=5 // pred_fallthru
      _
    %p153 = scmp.le.s32.totalorder 1, %s9
    %p154 = scmp.lt.s32.totalorder %s9, 3
    %p155 = pnand %p153, %p154
    %p156 = pneg %p155
    // Predicated region
    $region29: #{downblockpatch_forward.5} parent=5 // pred_check
      _
    $region30: #{downblockpatch_forward.5} parent=5 // pred_check_branch
      %158 = sbr.rel (%p155) target = $region32
    $region31: #{downblockpatch_forward.5} parent=5 // pred_region
      %s159 = ssub.s32 %s9, 1
      %s160 = sadd.s32 %s18, %s19
      %p161 = scmp.lt.s32.totalorder %s160, 1
      %s162 = scalar_select %p161, %s160, 1
      %s163 = smul.addr %s162, 8
      %s164 = scalar_lea.vmem %s0, %s163
      %p165 = pneg %p49
      %p166 = pneg %p46
      %p167 = pneg %p70
      %p168 = pneg %p67
      %p169 = pneg %p91
      %p170 = pneg %p88
      %p171 = pneg %p119
      %p172 = pneg %p116
      %s173 = sadd.s32 %s18, %s19
      %p174 = scmp.lt.s32.totalorder %s173, 1
      %s175 = scalar_select %p174, %s173, 1
      %s176 = smul.addr %s175, 8
      %s177 = scalar_lea.vmem %s3, %s176
      %s178 = sadd.s32 %s18, %s19
      %p179 = scmp.lt.s32.totalorder %s178, 1
      %s180 = scalar_select %p179, %s178, 1
      %s181 = smul.addr %s180, 8
      %s182 = scalar_lea.vmem %s0, %s181
      %s183 = sadd.s32 %s18, %s19
      %s184 = sadd.s32 %s18, %s19
      %p185 = scmp.lt.s32.totalorder %s184, 1
      %s186 = scalar_select %p185, %s184, 1
      %s187 = smul.addr %s186, 8
      %s188 = scalar_lea.vmem %s3, %s187
      %s189 = sadd.s32 %s18, %s19
      %v190 = vld [vmem:[%s182] sm:$0xff]
      %v191 = vld [vmem:[%s1] sm:$0xff]
      %193 = vset.pattern.permute.xlu0 0
      %194 = vperm.xlu0 %193, %v191
      %v195 = vpop.permute.xlu0 %194
      %v197 = vmul.f32 %v190, %v195
      %v198 = vld [vmem:[%s2] sm:$0xff]
      %200 = vset.pattern.permute.xlu0 0
      %201 = vperm.xlu0 %200, %v198
      %v202 = vpop.permute.xlu0 %201
      %v204 = vadd.f32 %v197, %v202
      %vm205 = vcmp.ge.f32.partialorder %v204, 0.0
      %v206 = vmul.f32 %v204, 0.2
      %v207 = vsel %vm205, %v204, %v206
      %208 = vst [vmem:[%s188] sm:$0xff] %v207
      %s209 = sadd.s32 %s18, %s19
      %p210 = scmp.lt.s32.totalorder %s209, 1
      %s211 = scalar_select %p210, %s209, 1
      %s212 = smul.addr %s211, 8
      %s213 = scalar_lea.vmem %s3, %s212
      // Predicated region
      $region33: #{downblockpatch_forward.5} parent=31 // pred_check
        %p214 = pneg %p116
      $region34: #{downblockpatch_forward.5} parent=31 // pred_check_branch
        %216 = sbr.rel (%p214) target = $region36
      $region35: #{downblockpatch_forward.5} parent=31 // pred_region
        %s217 = sadd.s32 %s18, %s19
      $region36: #{downblockpatch_forward.5} parent=31 // pred_fallthru
        _
    $region32: #{downblockpatch_forward.5} parent=5 // pred_fallthru
      _
    %p218 = scmp.le.s32.totalorder 2, %s9
    // Predicated region
    $region37: #{downblockpatch_forward.5} parent=5 // pred_check
      %p219 = pneg %p218
    $region38: #{downblockpatch_forward.5} parent=5 // pred_check_branch
      %221 = sbr.rel (%p219) target = $region40
    $region39: #{downblockpatch_forward.5} parent=5 // pred_region
      %s222 = ssub.s32 %s9, 2
      // Predicated region
      $region41: #{downblockpatch_forward.5} parent=39 // pred_check
        %p223 = pneg %p122
      $region42: #{downblockpatch_forward.5} parent=39 // pred_check_branch
        %225 = sbr.rel (%p223) target = $region44
      $region43: #{downblockpatch_forward.5} parent=39 // pred_region
        %s226 = sadd.s32 %s20, %s21
        %p227 = scmp.lt.s32.totalorder %s226, 1
        %s228 = scalar_select %p227, %s226, 1
        %s229 = smul.addr %s228, 8
        %s230 = scalar_lea.vmem %s3, %s229
      $region44: #{downblockpatch_forward.5} parent=39 // pred_fallthru
        _
    $region40: #{downblockpatch_forward.5} parent=5 // pred_fallthru
      _
  $region6: #{downblockpatch_forward.5} parent=0 // loop_footer
    %s13 = sadd.s32 1, %s9
  $region7: #{downblockpatch_forward.5} parent=0 // loop_footer_branch
    %8 = sbr.rel target = $region3
  $region8: #{downblockpatch_forward.5} parent=0 // loop_exit
    _

// kernel: downblockpatch_forward.3
$region0: #{downblockpatch_forward.3}
  #allocation0 [shape = 'u32[]', space=smem, size = 0x4, offset = 0x4, fixed_abs, tag = 'smem constant byte address 0x4 - core index']
  #allocation1 [shape = 'u32[72,128]{1,0:T(1,128)}', space=vmem, size = 0x9000, scoped, tag = 'internal scratch']
  %s0 = inlined_call_operand.vmem [shape: bf16[64,256], index: 0, kind: input, shape index: {}]
  %s1 = inlined_call_operand.vmem [shape: bf16[8,64], index: 1, kind: input, shape index: {}]
  %s2 = inlined_call_operand.vmem [shape: f32[8,1], index: 2, kind: input, shape index: {}]
  %s3 = inlined_call_operand.vmem [shape: f32[8,256], index: 3, kind: output, shape index: {0}]
  %s4 = inlined_call_operand.vmem [shape: f32[16,1], index: 4, kind: output, shape index: {1}]
  %s5 = inlined_call_operand.vmem [shape: f32[16,1], index: 5, kind: output, shape index: {2}]
  %6 = xla_tuple %s3, %s4, %s5
  %s7 = sld [smem:[#allocation0]]
  $region106: #{downblockpatch_forward.3} parent=0
    _
  %s9 = ssub.s32 1, %s7
  %s10 = scalar_select 0, %s9, %s7
  $region1: #{downblockpatch_forward.3} parent=0
    #allocation2 [shape = 'u8[32768]{0}', space=vmem, size = 0x8000, scoped, tag = 'input window, operand 0']
    loop: start=0, step=1, limit=4
    $region2: #{downblockpatch_forward.3} parent=1 // loop_pre_header
      _
    $region3: #{downblockpatch_forward.3} parent=1 // loop_header
      %s12 = sphi 0, %s16
      %p13 = scmp.ge.s32.totalorder %s12, 4
      %s19 = sphi 0, %s31
      %s20 = sphi 0, %s27
      %s21 = sphi 0, %s19
      %s22 = sphi 0, %s20
      %s23 = sphi 0, %s21
      %s24 = sphi 0, %s22
      %s36 = sphi 0, %s38
      %s39 = sphi 0, %s36
      %s40 = sphi 0, %s39
      %s56 = sphi 0, %s40
      %s60 = sphi 0, %s60
      %s62 = sphi 0, %s60
      %s63 = sphi 0, %s62
      %s77 = sphi 0, %s63
      %s81 = sphi 0, %s81
      %s83 = sphi 0, %s81
      %s84 = sphi 0, %s83
      %s98 = sphi 0, %s84
      %s106 = sphi 0, %s108
      %s109 = sphi 0, %s106
      %s110 = sphi 0, %s109
      %s126 = sphi 0, %s110
      %s132 = sphi 0, %s134
      %s135 = sphi 0, %s132
      %s136 = sphi 0, %s135
      %s152 = sphi 0, %s136
      %s158 = sphi 0, %s160
      %s161 = sphi 0, %s158
      %s162 = sphi 0, %s161
      %s178 = sphi 0, %s162
    $region4: #{downblockpatch_forward.3} parent=1 // loop_header_branch
      %15 = sbr.rel (%p13) target = $region8
    $region5: #{downblockpatch_forward.3} parent=1 // loop_body
      %s17 = ssub.s32 %s12, 1
      %s18 = ssub.s32 %s12, 2
      %s25 = sadd.s32 1, %s20
      %p26 = scmp.ge.s32.totalorder %s25, 1
      %s27 = scalar_select %p26, 0, %s25
      %s28 = sadd.s32 1, %s19
      %s29 = scalar_select %p26, %s28, %s19
      %p30 = scmp.ge.s32.totalorder %s29, 2
      %s31 = scalar_select %p30, 0, %s29
      %s32 = sadd.s32 %s19, %s20
      %s33 = sadd.s32 %s31, %s27
      %s34 = ssub.s32 %s32, %s33
      %p35 = scmp.eq.s32.totalorder %s34, 0
      %s37 = sadd.s32 %s36, 1
      %s38 = scalar_select %p35, %s36, %s37
      %p41 = pneg %p35
      %p42 = scmp.eq.s32.totalorder %s12, 1
      %p43 = por %p41, %p42
      %p44 = scmp.ne.s32.totalorder %s36, %s39
      %p45 = scmp.eq.s32.totalorder %s12, 0
      %p46 = por %p44, %p45
      %p47 = scmp.ne.s32.totalorder %s36, %s39
      %p48 = scmp.eq.s32.totalorder %s17, 1
      %p49 = por %p47, %p48
      %p50 = scmp.ne.s32.totalorder %s39, %s40
      %p51 = scmp.eq.s32.totalorder %s17, 0
      %p52 = por %p50, %p51
      %p53 = scmp.ne.s32.totalorder %s39, %s40
      %p54 = scmp.eq.s32.totalorder %s18, 1
      %p55 = por %p53, %p54
      %p57 = scmp.ne.s32.totalorder %s40, %s56
      %p58 = scmp.eq.s32.totalorder %s18, 0
      %p59 = por %p57, %p58
      %s61 = sadd.s32 %s60, 1
      %p64 = scmp.eq.s32.totalorder %s12, 1
      %p65 = scmp.ne.s32.totalorder %s60, %s62
      %p66 = scmp.eq.s32.totalorder %s12, 0
      %p67 = por %p65, %p66
      %p68 = scmp.ne.s32.totalorder %s60, %s62
      %p69 = scmp.eq.s32.totalorder %s17, 1
      %p70 = por %p68, %p69
      %p71 = scmp.ne.s32.totalorder %s62, %s63
      %p72 = scmp.eq.s32.totalorder %s17, 0
      %p73 = por %p71, %p72
      %p74 = scmp.ne.s32.totalorder %s62, %s63
      %p75 = scmp.eq.s32.totalorder %s18, 1
      %p76 = por %p74, %p75
      %p78 = scmp.ne.s32.totalorder %s63, %s77
      %p79 = scmp.eq.s32.totalorder %s18, 0
      %p80 = por %p78, %p79
      %s82 = sadd.s32 %s81, 1
      %p85 = scmp.eq.s32.totalorder %s12, 1
      %p86 = scmp.ne.s32.totalorder %s81, %s83
      %p87 = scmp.eq.s32.totalorder %s12, 0
      %p88 = por %p86, %p87
      %p89 = scmp.ne.s32.totalorder %s81, %s83
      %p90 = scmp.eq.s32.totalorder %s17, 1
      %p91 = por %p89, %p90
      %p92 = scmp.ne.s32.totalorder %s83, %s84
      %p93 = scmp.eq.s32.totalorder %s17, 0
      %p94 = por %p92, %p93
      %p95 = scmp.ne.s32.totalorder %s83, %s84
      %p96 = scmp.eq.s32.totalorder %s18, 1
      %p97 = por %p95, %p96
      %p99 = scmp.ne.s32.totalorder %s84, %s98
      %p100 = scmp.eq.s32.totalorder %s18, 0
      %p101 = por %p99, %p100
      %s102 = sadd.s32 %s19, %s20
      %s103 = sadd.s32 %s31, %s27
      %s104 = ssub.s32 %s102, %s103
      %p105 = scmp.eq.s32.totalorder %s104, 0
      %s107 = sadd.s32 %s106, 1
      %s108 = scalar_select %p105, %s106, %s107
      %p111 = pneg %p105
      %p112 = scmp.eq.s32.totalorder %s12, 1
      %p113 = por %p111, %p112
      %p114 = scmp.ne.s32.totalorder %s106, %s109
      %p115 = scmp.eq.s32.totalorder %s12, 0
      %p116 = por %p114, %p115
      %p117 = scmp.ne.s32.totalorder %s106, %s109
      %p118 = scmp.eq.s32.totalorder %s17, 1
      %p119 = por %p117, %p118
      %p120 = scmp.ne.s32.totalorder %s109, %s110
      %p121 = scmp.eq.s32.totalorder %s17, 0
      %p122 = por %p120, %p121
      %p123 = scmp.ne.s32.totalorder %s109, %s110
      %p124 = scmp.eq.s32.totalorder %s18, 1
      %p125 = por %p123, %p124
      %p127 = scmp.ne.s32.totalorder %s110, %s126
      %p128 = scmp.eq.s32.totalorder %s18, 0
      %p129 = por %p127, %p128
      %s130 = ssub.s32 %s19, %s31
      %p131 = scmp.eq.s32.totalorder %s130, 0
      %s133 = sadd.s32 %s132, 1
      %s134 = scalar_select %p131, %s132, %s133
      %p137 = pneg %p131
      %p138 = scmp.eq.s32.totalorder %s12, 1
      %p139 = por %p137, %p138
      %p140 = scmp.ne.s32.totalorder %s132, %s135
      %p141 = scmp.eq.s32.totalorder %s12, 0
      %p142 = por %p140, %p141
      %p143 = scmp.ne.s32.totalorder %s132, %s135
      %p144 = scmp.eq.s32.totalorder %s17, 1
      %p145 = por %p143, %p144
      %p146 = scmp.ne.s32.totalorder %s135, %s136
      %p147 = scmp.eq.s32.totalorder %s17, 0
      %p148 = por %p146, %p147
      %p149 = scmp.ne.s32.totalorder %s135, %s136
      %p150 = scmp.eq.s32.totalorder %s18, 1
      %p151 = por %p149, %p150
      %p153 = scmp.ne.s32.totalorder %s136, %s152
      %p154 = scmp.eq.s32.totalorder %s18, 0
      %p155 = por %p153, %p154
      %s156 = ssub.s32 %s19, %s31
      %p157 = scmp.eq.s32.totalorder %s156, 0
      %s159 = sadd.s32 %s158, 1
      %s160 = scalar_select %p157, %s158, %s159
      %p163 = pneg %p157
      %p164 = scmp.eq.s32.totalorder %s12, 1
      %p165 = por %p163, %p164
      %p166 = scmp.ne.s32.totalorder %s158, %s161
      %p167 = scmp.eq.s32.totalorder %s12, 0
      %p168 = por %p166, %p167
      %p169 = scmp.ne.s32.totalorder %s158, %s161
      %p170 = scmp.eq.s32.totalorder %s17, 1
      %p171 = por %p169, %p170
      %p172 = scmp.ne.s32.totalorder %s161, %s162
      %p173 = scmp.eq.s32.totalorder %s17, 0
      %p174 = por %p172, %p173
      %p175 = scmp.ne.s32.totalorder %s161, %s162
      %p176 = scmp.eq.s32.totalorder %s18, 1
      %p177 = por %p175, %p176
      %p179 = scmp.ne.s32.totalorder %s162, %s178
      %p180 = scmp.eq.s32.totalorder %s18, 0
      %p181 = por %p179, %p180
      %p182 = scmp.le.s32.totalorder 1, %s12
      %p183 = scmp.lt.s32.totalorder %s12, 3
      %p184 = pnand %p182, %p183
      %p185 = pneg %p184
      // Predicated region
      $region9: #{downblockpatch_forward.3} parent=5 // pred_check
        _
      $region10: #{downblockpatch_forward.3} parent=5 // pred_check_branch
        %187 = sbr.rel (%p184) target = $region12
      $region11: #{downblockpatch_forward.3} parent=5 // pred_region
        %s188 = ssub.s32 %s12, 1
        // Predicated region
        $region13: #{downblockpatch_forward.3} parent=11 // pred_check
          %p189 = pneg %p73
        $region14: #{downblockpatch_forward.3} parent=11 // pred_check_branch
          %191 = sbr.rel (%p189) target = $region16
        $region15: #{downblockpatch_forward.3} parent=11 // pred_region
          _
        $region16: #{downblockpatch_forward.3} parent=11 // pred_fallthru
          _
        // Predicated region
        $region17: #{downblockpatch_forward.3} parent=11 // pred_check
          %p192 = pneg %p94
        $region18: #{downblockpatch_forward.3} parent=11 // pred_check_branch
          %194 = sbr.rel (%p192) target = $region20
        $region19: #{downblockpatch_forward.3} parent=11 // pred_region
          _
        $region20: #{downblockpatch_forward.3} parent=11 // pred_fallthru
          _
      $region12: #{downblockpatch_forward.3} parent=5 // pred_fallthru
        _
      %p195 = scmp.lt.s32.totalorder %s12, 2
      // Predicated region
      $region21: #{downblockpatch_forward.3} parent=5 // pred_check
        %p196 = pneg %p195
      $region22: #{downblockpatch_forward.3} parent=5 // pred_check_branch
        %198 = sbr.rel (%p196) target = $region24
      $region23: #{downblockpatch_forward.3} parent=5 // pred_region
        // Predicated region
        $region25: #{downblockpatch_forward.3} parent=23 // pred_check
          %p199 = pneg %p46
        $region26: #{downblockpatch_forward.3} parent=23 // pred_check_branch
          %201 = sbr.rel (%p199) target = $region28
        $region27: #{downblockpatch_forward.3} parent=23 // pred_region
          %s202 = sand.u32 %s36, 1
          %s203 = sand.u32 %s36, 1
          %s204 = smul.addr %s203, 32
          %s205 = scalar_lea.vmem [#allocation2], %s204
          %s206 = sadd.s32 %s19, %s20
          %s207 = smul.addr %s206, 4
          %s208 = scalar_lea.vmem %s0, %s207
          // Predicated region
          $region29: #{downblockpatch_forward.3} parent=27 // pred_check
            _
          $region30: #{downblockpatch_forward.3} parent=27 // pred_check_branch
            %210 = sbr.rel (0) target = $region32
          $region31: #{downblockpatch_forward.3} parent=27 // pred_region
            // Predicated region
            $region33: #{downblockpatch_forward.3} parent=31 // pred_check
              _
            $region34: #{downblockpatch_forward.3} parent=31 // pred_check_branch
              %212 = sbr.rel target = $region36
            $region35: #{downblockpatch_forward.3} parent=31 // pred_region
              // Predicated region
              $region48: #{downblockpatch_forward.3} parent=35 // pred_check
                _
              $region49: #{downblockpatch_forward.3} parent=35 // pred_check_branch
                %242 = sbr.rel (0) target = $region51
              $region50: #{downblockpatch_forward.3} parent=35 // pred_region
                loop: start=0, step=1, limit=1
                $region52: #{downblockpatch_forward.3} parent=50 // loop_pre_header
                  _
                $region53: #{downblockpatch_forward.3} parent=50 // loop_header
                  %s244 = sphi 0, %s248
                  %p245 = scmp.ge.s32.totalorder %s244, 1
                  %s249 = sphi %s208, %s208
                  %s250 = sphi %s205, %s205
                $region54: #{downblockpatch_forward.3} parent=50 // loop_header_branch
                  %247 = sbr.rel (%p245) target = $region58
                $region55: #{downblockpatch_forward.3} parent=50 // loop_body
                  _
                $region56: #{downblockpatch_forward.3} parent=50 // loop_footer
                  %s248 = sadd.s32 1, %s244
                $region57: #{downblockpatch_forward.3} parent=50 // loop_footer_branch
                  %243 = sbr.rel target = $region53
                $region58: #{downblockpatch_forward.3} parent=50 // loop_exit
                  _
                %s252 = ssub.s32 16, 1
                loop: start=0, step=1, limit=1
                $region59: #{downblockpatch_forward.3} parent=50 // loop_pre_header
                  _
                $region60: #{downblockpatch_forward.3} parent=50 // loop_header
                  %s254 = sphi 0, %s258
                  %p255 = scmp.ge.s32.totalorder %s254, 1
                  %s259 = sphi %s208, %s208
                  %s260 = sphi %s205, %s205
                $region61: #{downblockpatch_forward.3} parent=50 // loop_header_branch
                  %257 = sbr.rel (%p255) target = $region65
                $region62: #{downblockpatch_forward.3} parent=50 // loop_body
                  %v261 = vld [vmem:[%s259] sm:%s252]
                  %262 = vst [vmem:[%s260] sm:%s252] %v261
                  %v263 = vld [vmem:[%s259 + $0x8] sm:%s252]
                  %264 = vst [vmem:[%s260 + $0x4] sm:%s252] %v263
                  %v265 = vld [vmem:[%s259 + $0x10] sm:%s252]
                  %266 = vst [vmem:[%s260 + $0x8] sm:%s252] %v265
                  %v267 = vld [vmem:[%s259 + $0x18] sm:%s252]
                  %268 = vst [vmem:[%s260 + $0xc] sm:%s252] %v267
                  %v269 = vld [vmem:[%s259 + $0x20] sm:%s252]
                  %270 = vst [vmem:[%s260 + $0x10] sm:%s252] %v269
                  %v271 = vld [vmem:[%s259 + $0x28] sm:%s252]
                  %272 = vst [vmem:[%s260 + $0x14] sm:%s252] %v271
                  %v273 = vld [vmem:[%s259 + $0x30] sm:%s252]
                  %274 = vst [vmem:[%s260 + $0x18] sm:%s252] %v273
                  %v275 = vld [vmem:[%s259 + $0x38] sm:%s252]
                  %276 = vst [vmem:[%s260 + $0x1c] sm:%s252] %v275
                $region63: #{downblockpatch_forward.3} parent=50 // loop_footer
                  %s258 = sadd.s32 1, %s254
                $region64: #{downblockpatch_forward.3} parent=50 // loop_footer_branch
                  %253 = sbr.rel target = $region60
                $region65: #{downblockpatch_forward.3} parent=50 // loop_exit
                  _
              $region51: #{downblockpatch_forward.3} parent=35 // pred_fallthru
                _
            $region36: #{downblockpatch_forward.3} parent=31 // pred_fallthru
              _
            // Predicated region
            $region37: #{downblockpatch_forward.3} parent=31 // pred_check
              _
            $region38: #{downblockpatch_forward.3} parent=31 // pred_check_branch
              %214 = sbr.rel (0) target = $region40
            $region39: #{downblockpatch_forward.3} parent=31 // pred_region
              %s216 = ssub.s32 16, 1
              loop: start=0, step=1, limit=1
              $region41: #{downblockpatch_forward.3} parent=39 // loop_pre_header
                _
              $region42: #{downblockpatch_forward.3} parent=39 // loop_header
                %s218 = sphi 0, %s222
                %p219 = scmp.ge.s32.totalorder %s218, 1
                %s223 = sphi %s208, %s208
                %s224 = sphi %s205, %s205
              $region43: #{downblockpatch_forward.3} parent=39 // loop_header_branch
                %221 = sbr.rel (%p219) target = $region47
              $region44: #{downblockpatch_forward.3} parent=39 // loop_body
                %v225 = vld [vmem:[%s223] sm:%s216]
                %226 = vst [vmem:[%s224] sm:%s216] %v225
                %v227 = vld [vmem:[%s223 + $0x8] sm:%s216]
                %228 = vst [vmem:[%s224 + $0x4] sm:%s216] %v227
                %v229 = vld [vmem:[%s223 + $0x10] sm:%s216]
                %230 = vst [vmem:[%s224 + $0x8] sm:%s216] %v229
                %v231 = vld [vmem:[%s223 + $0x18] sm:%s216]
                %232 = vst [vmem:[%s224 + $0xc] sm:%s216] %v231
                %v233 = vld [vmem:[%s223 + $0x20] sm:%s216]
                %234 = vst [vmem:[%s224 + $0x10] sm:%s216] %v233
                %v235 = vld [vmem:[%s223 + $0x28] sm:%s216]
                %236 = vst [vmem:[%s224 + $0x14] sm:%s216] %v235
                %v237 = vld [vmem:[%s223 + $0x30] sm:%s216]
                %238 = vst [vmem:[%s224 + $0x18] sm:%s216] %v237
                %v239 = vld [vmem:[%s223 + $0x38] sm:%s216]
                %240 = vst [vmem:[%s224 + $0x1c] sm:%s216] %v239
              $region45: #{downblockpatch_forward.3} parent=39 // loop_footer
                %s222 = sadd.s32 1, %s218
              $region46: #{downblockpatch_forward.3} parent=39 // loop_footer_branch
                %217 = sbr.rel target = $region42
              $region47: #{downblockpatch_forward.3} parent=39 // loop_exit
                _
            $region40: #{downblockpatch_forward.3} parent=31 // pred_fallthru
              _
          $region32: #{downblockpatch_forward.3} parent=27 // pred_fallthru
            _
          %277 = vnop
        $region28: #{downblockpatch_forward.3} parent=23 // pred_fallthru
          _
      $region24: #{downblockpatch_forward.3} parent=5 // pred_fallthru
        _
      %p278 = scmp.le.s32.totalorder 1, %s12
      %p279 = scmp.lt.s32.totalorder %s12, 3
      %p280 = pnand %p278, %p279
      %p281 = pneg %p280
      // Predicated region
      $region66: #{downblockpatch_forward.3} parent=5 // pred_check
        _
      $region67: #{downblockpatch_forward.3} parent=5 // pred_check_branch
        %283 = sbr.rel (%p280) target = $region69
      $region68: #{downblockpatch_forward.3} parent=5 // pred_region
        %s284 = ssub.s32 %s12, 1
        %s285 = sand.u32 %s39, 1
        %s286 = sand.u32 %s39, 1
        %s287 = smul.addr %s286, 32
        %s288 = scalar_lea.vmem [#allocation2], %s287
        // Predicated region
        $region70: #{downblockpatch_forward.3} parent=68 // pred_check
          %p289 = pneg %p52
        $region71: #{downblockpatch_forward.3} parent=68 // pred_check_branch
          %291 = sbr.rel (%p289) target = $region73
        $region72: #{downblockpatch_forward.3} parent=68 // pred_region
          _
        $region73: #{downblockpatch_forward.3} parent=68 // pred_fallthru
          _
        %s292 = sand.u32 %s39, 1
        %s293 = sand.u32 %s39, 1
        %s294 = smul.addr %s293, 32
        %s295 = scalar_lea.vmem [#allocation2], %s294
        %p296 = pneg %p52
        %p297 = pneg %p49
        %p298 = pneg %p73
        %p299 = pneg %p70
        %p300 = pneg %p94
        %p301 = pneg %p91
        %p302 = pneg %p122
        %p303 = pneg %p119
        %s304 = sadd.s32 %s21, %s22
        %p305 = scmp.lt.s32.totalorder %s304, 1
        %s306 = scalar_select %p305, %s304, 1
        %s307 = smul.addr %s306, 8
        %s308 = scalar_lea.vmem %s3, %s307
        %p309 = pneg %p148
        %p310 = pneg %p145
        %p311 = scmp.lt.s32.totalorder %s21, 1
        %s312 = scalar_select %p311, %s21, 1
        %s313 = smul.addr %s312, 8
        %s314 = scalar_lea.vmem %s4, %s313
        %p315 = pneg %p174
        %p316 = pneg %p171
        %p317 = scmp.lt.s32.totalorder %s21, 1
        %s318 = scalar_select %p317, %s21, 1
        %s319 = smul.addr %s318, 8
        %s320 = scalar_lea.vmem %s5, %s319
        %s321 = sadd.s32 %s21, %s22
        %s322 = sadd.s32 %s21, %s22
        %p323 = scmp.lt.s32.totalorder %s322, 1
        %s324 = scalar_select %p323, %s322, 1
        %s325 = smul.addr %s324, 8
        %s326 = scalar_lea.vmem %s3, %s325
        %s327 = sadd.s32 %s21, %s22
        %p328 = scmp.lt.s32.totalorder %s21, 1
        %s329 = scalar_select %p328, %s21, 1
        %s330 = smul.addr %s329, 8
        %s331 = scalar_lea.vmem %s4, %s330
        %p332 = scmp.lt.s32.totalorder %s21, 1
        %s333 = scalar_select %p332, %s21, 1
        %s334 = smul.addr %s333, 8
        %s335 = scalar_lea.vmem %s5, %s334
        %v337 = vld [vmem:[%s1] sm:$0xf]
        %v338 = vld [vmem:[%s288] sm:$0xf]
        %v339 = vld [vmem:[%s288 + $0x4] sm:$0xf]
        %v340 = vld [vmem:[%s288 + $0x8] sm:$0xf]
        %v341 = vld [vmem:[%s288 + $0xc] sm:$0xf]
        %v342 = vld [vmem:[%s288 + $0x10] sm:$0xf]
        %v343 = vld [vmem:[%s288 + $0x14] sm:$0xf]
        %v344 = vld [vmem:[%s288 + $0x18] sm:$0xf]
        %v345 = vld [vmem:[%s288 + $0x1c] sm:$0xf]
        %v346 = vld [vmem:[%s2] sm:$0xff]
        %348 = vset.pattern.permute.xlu0 0
        %349 = vperm.xlu0 %348, %v346
        %v350 = vpop.permute.xlu0 %349
        %v360 = vunpack.c.l.b16 %v338
        %v361 = vunpack.c.l.b16 %v339
        %v362 = vunpack.c.l.b16 %v340
        %v363 = vunpack.c.l.b16 %v341
        %v364 = vunpack.c.l.b16 %v342
        %v365 = vunpack.c.l.b16 %v343
        %v366 = vunpack.c.l.b16 %v344
        %v367 = vunpack.c.l.b16 %v345
        %v368 = vpack.c.b16 %v361, %v360
        %v369 = vpack.c.b16 %v363, %v362
        %v370 = vpack.c.b16 %v365, %v364
        %v371 = vpack.c.b16 %v367, %v366
        %vm376 = vcmask 523264
        %v378 = vsel %vm376, %v337, 0
        %380 = vmatpush.bf16.msra.mxu0 0
        %381 = vmatpush.bf16.msra.mxu0 0
        %382 = vmatpush.bf16.msra.mxu0 0
        %383 = vmatpush.bf16.msra.mxu0 0
        %384 = vmatpush.bf16.msra.mxu0 %v371
        %385 = vmatpush.bf16.msra.mxu0 %v370
        %386 = vmatpush.bf16.msra.mxu0 %v369
        %387 = vmatpush.bf16.msra.mxu0 %v368
        %388 = vmatmul.bf16.gmra.mxu0 %v378
        %v389 = vpop.f32.mrf.mxu0
        %v390 = vadd.f32 %v350, %v389
        %v391 = vpop.f32.mrf.mxu0
        %392 = vdwg.mxu0
        %393 = vst [vmem:[%s326] sm:$0xff] %v390
        %p394 = scmp.eq.s32.totalorder %s22, 0
        // Predicated region
        $region74: #{downblockpatch_forward.3} parent=68 // pred_check
          %p395 = pneg %p394
        $region75: #{downblockpatch_forward.3} parent=68 // pred_check_branch
          %397 = sbr.rel (%p395) target = $region77
        $region76: #{downblockpatch_forward.3} parent=68 // pred_region
          %vm398 = vcmask 7168
          %399 = vst.msk [vmem:[%s331] sm:$0xff] %vm398, 0.0
          %400 = vst.msk [vmem:[%s335] sm:$0xff] %vm398, 0.0
        $region77: #{downblockpatch_forward.3} parent=68 // pred_fallthru
          _
        %s401 = sadd.s32 %s21, %s22
        %s402 = smul.u32 %s401, 128
        %v403 = vlaneseq
        %v404 = vand.u32 %v403, 127
        %v405 = vstv %s402
        %v406 = vadd.s32 %v404, %v405
        %vm407 = vcmp.lt.s32.totalorder %v406, 128
        %v408 = vsel %vm407, %v390, 0.0
        %v409 = vld [vmem:[%s331] sm:$0xff]
        %410 = vadd.xlane.f32.xlu0 %v408
        %v411 = vpop.xlane.xlu0 %410
        %v412 = vadd.f32 %v409, %v411
        %vm413 = vcmask 7168
        %414 = vst.msk [vmem:[%s331] sm:$0xff] %vm413, %v412
        %v415 = vld [vmem:[%s335] sm:$0xff]
        %v416 = vmul.f32 %v408, %v408
        %417 = vadd.xlane.f32.xlu0 %v416
        %v418 = vpop.xlane.xlu0 %417
        %v419 = vadd.f32 %v415, %v418
        %420 = vst.msk [vmem:[%s335] sm:$0xff] %vm413, %v419
        %s421 = sadd.s32 %s21, %s22
        %p422 = scmp.lt.s32.totalorder %s421, 1
        %s423 = scalar_select %p422, %s421, 1
        %s424 = smul.addr %s423, 8
        %s425 = scalar_lea.vmem %s3, %s424
        %p426 = scmp.lt.s32.totalorder %s21, 1
        %s427 = scalar_select %p426, %s21, 1
        %s428 = smul.addr %s427, 8
        %s429 = scalar_lea.vmem %s4, %s428
        %p430 = scmp.lt.s32.totalorder %s21, 1
        %s431 = scalar_select %p430, %s21, 1
        %s432 = smul.addr %s431, 8
        %s433 = scalar_lea.vmem %s5, %s432
        // Predicated region
        $region78: #{downblockpatch_forward.3} parent=68 // pred_check
          %p434 = pneg %p119
        $region79: #{downblockpatch_forward.3} parent=68 // pred_check_branch
          %436 = sbr.rel (%p434) target = $region81
        $region80: #{downblockpatch_forward.3} parent=68 // pred_region
          %s437 = sadd.s32 %s21, %s22
        $region81: #{downblockpatch_forward.3} parent=68 // pred_fallthru
          _
        // Predicated region
        $region82: #{downblockpatch_forward.3} parent=68 // pred_check
          %p438 = pneg %p145
        $region83: #{downblockpatch_forward.3} parent=68 // pred_check_branch
          %440 = sbr.rel (%p438) target = $region85
        $region84: #{downblockpatch_forward.3} parent=68 // pred_region
          _
        $region85: #{downblockpatch_forward.3} parent=68 // pred_fallthru
          _
        // Predicated region
        $region86: #{downblockpatch_forward.3} parent=68 // pred_check
          %p441 = pneg %p171
        $region87: #{downblockpatch_forward.3} parent=68 // pred_check_branch
          %443 = sbr.rel (%p441) target = $region89
        $region88: #{downblockpatch_forward.3} parent=68 // pred_region
          _
        $region89: #{downblockpatch_forward.3} parent=68 // pred_fallthru
          _
      $region69: #{downblockpatch_forward.3} parent=5 // pred_fallthru
        _
      %p444 = scmp.le.s32.totalorder 2, %s12
      // Predicated region
      $region90: #{downblockpatch_forward.3} parent=5 // pred_check
        %p445 = pneg %p444
      $region91: #{downblockpatch_forward.3} parent=5 // pred_check_branch
        %447 = sbr.rel (%p445) target = $region93
      $region92: #{downblockpatch_forward.3} parent=5 // pred_region
        %s448 = ssub.s32 %s12, 2
        // Predicated region
        $region94: #{downblockpatch_forward.3} parent=92 // pred_check
          %p449 = pneg %p125
        $region95: #{downblockpatch_forward.3} parent=92 // pred_check_branch
          %451 = sbr.rel (%p449) target = $region97
        $region96: #{downblockpatch_forward.3} parent=92 // pred_region
          %s452 = sadd.s32 %s23, %s24
          %p453 = scmp.lt.s32.totalorder %s452, 1
          %s454 = scalar_select %p453, %s452, 1
          %s455 = smul.addr %s454, 8
          %s456 = scalar_lea.vmem %s3, %s455
        $region97: #{downblockpatch_forward.3} parent=92 // pred_fallthru
          _
        // Predicated region
        $region98: #{downblockpatch_forward.3} parent=92 // pred_check
          %p457 = pneg %p151
        $region99: #{downblockpatch_forward.3} parent=92 // pred_check_branch
          %459 = sbr.rel (%p457) target = $region101
        $region100: #{downblockpatch_forward.3} parent=92 // pred_region
          %p460 = scmp.lt.s32.totalorder %s23, 1
          %s461 = scalar_select %p460, %s23, 1
          %s462 = smul.addr %s461, 8
          %s463 = scalar_lea.vmem %s4, %s462
        $region101: #{downblockpatch_forward.3} parent=92 // pred_fallthru
          _
        // Predicated region
        $region102: #{downblockpatch_forward.3} parent=92 // pred_check
          %p464 = pneg %p177
        $region103: #{downblockpatch_forward.3} parent=92 // pred_check_branch
          %466 = sbr.rel (%p464) target = $region105
        $region104: #{downblockpatch_forward.3} parent=92 // pred_region
          %p467 = scmp.lt.s32.totalorder %s23, 1
          %s468 = scalar_select %p467, %s23, 1
          %s469 = smul.addr %s468, 8
          %s470 = scalar_lea.vmem %s5, %s469
        $region105: #{downblockpatch_forward.3} parent=92 // pred_fallthru
          _
      $region93: #{downblockpatch_forward.3} parent=5 // pred_fallthru
        _
    $region6: #{downblockpatch_forward.3} parent=1 // loop_footer
      %s16 = sadd.s32 1, %s12
    $region7: #{downblockpatch_forward.3} parent=1 // loop_footer_branch
      %11 = sbr.rel target = $region3
    $region8: #{downblockpatch_forward.3} parent=1 // loop_exit
      _

</llo_original>
